<compile_context>
chip_gen: v5e
topology: v5e:2x2
jax: 0.10.0
libtpu: 0.0.40
codegen_flags: <defaults>
</compile_context>

<pallas_src>
import functools

import jax
import jax.numpy as jnp
from jax.experimental import pallas as pl
from jax.experimental.pallas import tpu as pltpu

VOCAB = 118
VOCAB_PAD = 128            # lane-aligned vocab block (rows 118..127 are zero)
ROWS_TILE_MAX = 1024       # max output rows per grid step
F_TILE_MAX = 2048          # max output lanes per grid step
MAX_GROUPS = 16            # cap on atoms packed per 128-lane output row
# Double-buffered block budget (bytes): 2 bufs x (idx + table + out blocks).
# 12 MiB fits v5e's 16 MiB default scoped-VMEM limit and leaves headroom on
# v6e (32 MiB default) and v7x (64 MiB physical), so no vmem_limit_bytes
# override is needed on any chip.
VMEM_BLOCK_BUDGET = 12 * 1024 * 1024


def _round_up(x, m):
    return ((x + m - 1) // m) * m


def _cdiv(a, b):
    return -(-a // b)


def _prev_pow2(x):
    return 1 << (max(int(x), 1).bit_length() - 1)


def _next_pow2(x):
    x = max(int(x), 1)
    return 1 << (x - 1).bit_length()


def _groups_for(n_features):
    """Atoms packed per 128-lane output row (1 = no packing)."""
    if 0 < n_features < 128 and 128 % n_features == 0:
        g = 128 // n_features
        if g <= MAX_GROUPS:
            return g
    return 1


def _embed_kernel(idx_ref, table_ref, out_ref, *, groups):
    """Row gather as a one-hot MXU matmul.

    idx_ref:   (rows_tile, groups) int32  -- slot g of row r holds atom r*G+g
    table_ref: (groups*128, f_tile) f32   -- block-diag replicated when G > 1
    out_ref:   (rows_tile, f_tile)  f32
    """
    rows = out_ref.shape[0]
    k_dim = groups * VOCAB_PAD
    idx = idx_ref[...]                                        # (rows, groups)
    k_iota = jax.lax.broadcasted_iota(jnp.int32, (rows, k_dim), 1)
    # one_hot[r, 128*g + idx[r, g]] = 1; group hits are disjoint because the
    # wrapper clamps all indices into [0, 127].
    hot = idx[:, 0:1] == k_iota
    for g in range(1, groups):                                # static, G <= 16
        hot = jnp.logical_or(hot, (idx[:, g:g + 1] + g * VOCAB_PAD) == k_iota)
    one_hot = hot.astype(jnp.float32)
    out_ref[...] = jnp.dot(
        one_hot,
        table_ref[...],
        preferred_element_type=jnp.float32,
        precision=jax.lax.Precision.HIGHEST,   # exact f32 row reproduction
    )


def pad_embedding_table(table):
    """Init-time transform of the (118, n_features) embedding weight.

    n_features < 128 and dividing 128 -> block-diagonal (G*128, 128) table
        (G = 128 // n_features atoms packed per 128-lane output row).
    otherwise                         -> (128, round_up(n_features, 128)).

    Call ONCE at module-construction time, not per forward.
    """
    table = jnp.asarray(table, dtype=jnp.float32)
    n_features = table.shape[1]
    groups = _groups_for(n_features)
    if groups > 1:
        tp = jnp.zeros((groups * VOCAB_PAD, VOCAB_PAD), jnp.float32)
        for g in range(groups):
            tp = tp.at[g * VOCAB_PAD:g * VOCAB_PAD + VOCAB,
                       g * n_features:(g + 1) * n_features].set(table)
        return tp
    f_pad = _round_up(max(n_features, 1), 128)
    tp = jnp.zeros((VOCAB_PAD, f_pad), jnp.float32)
    tp = tp.at[:VOCAB, :n_features].set(table)
    return tp


def _pick_f_tile(f_pad):
    """Largest multiple of 128 dividing f_pad that is <= F_TILE_MAX."""
    if f_pad <= F_TILE_MAX:
        return f_pad
    best = 128
    for t in range(128, F_TILE_MAX + 1, 128):
        if f_pad % t == 0:
            best = t
    return best


def _pick_rows_tile(rows_bucket, f_tile, k_dim, groups):
    """Largest pow2 row tile fitting the double-buffered VMEM budget."""
    budget_rows = (VMEM_BLOCK_BUDGET // 8 - k_dim * f_tile) // (f_tile + groups)
    rows_tile = min(ROWS_TILE_MAX, max(8, budget_rows), rows_bucket)
    if rows_bucket >= 16:
        # Force >= 2 row blocks so v7x megacore keeps both TensorCores busy
        # (costs one extra ~0.35us grid step on v5e/v6e -- negligible).
        rows_tile = min(rows_tile, rows_bucket // 2)
    return max(8, _prev_pow2(rows_tile))


@functools.partial(jax.jit, static_argnames=("rows_tile", "f_tile", "groups"))
def _atom_embed_padded(idx, table_pad, *, rows_tile, f_tile, groups):
    rows_pad = idx.shape[0]
    k_dim, f_pad = table_pad.shape
    # Rows innermost: the table block index (0, j) is constant along the
    # inner axis, so the table tile is fetched once per feature block.
    grid = (f_pad // f_tile, rows_pad // rows_tile)
    return pl.pallas_call(
        functools.partial(_embed_kernel, groups=groups),
        out_shape=jax.ShapeDtypeStruct((rows_pad, f_pad), jnp.float32),
        grid_spec=pltpu.PrefetchScalarGridSpec(
            num_scalar_prefetch=0,
            grid=grid,
            in_specs=[
                pl.BlockSpec((rows_tile, groups), lambda j, i: (i, 0)),
                pl.BlockSpec((k_dim, f_tile), lambda j, i: (0, j)),
            ],
            out_specs=pl.BlockSpec((rows_tile, f_tile), lambda j, i: (i, j)),
        ),
        compiler_params=pltpu.CompilerParams(
            # Both axes independent -> megacore sharding on v7x.
            dimension_semantics=("parallel", "parallel"),
        ),
    )(idx, table_pad)


def atom_embed(atomic_numbers, table_pad, n_features, *, bucket=True):
    """Pallas equivalent of AtomEmbed.forward.

    atomic_numbers: int array, shape (n_atoms,)
    table_pad:      output of pad_embedding_table (init-time transform)
    n_features:     original (unpadded) embedding width
    returns:        float32 (n_atoms, n_features)

    Invalid indices (< 0 or >= 118) yield all-zero rows instead of raising
    like torch.nn.Embedding.
    """
    # NOTE: for tiny problems (n_atoms * 128 < ~64K elements) a plain XLA
    # gather of table_pad would beat the pallas_call dispatch overhead; kept
    # on the Pallas path here so the kernel is always exercised.
    n_atoms = int(atomic_numbers.shape[0])
    if n_atoms == 0:
        return jnp.zeros((0, n_features), jnp.float32)

    groups = _groups_for(n_features)
    k_dim, f_pad = table_pad.shape
    assert k_dim == groups * VOCAB_PAD, "table_pad does not match n_features"

    rows_needed = _cdiv(n_atoms, groups)
    if bucket:
        # Bucket the row count so varying molecule sizes reuse compiled
        # kernels: next pow2 up to 1024 rows, then 1024-row steps.
        rows_bucket = (_next_pow2(rows_needed) if rows_needed <= ROWS_TILE_MAX
                       else _round_up(rows_needed, ROWS_TILE_MAX))
    else:
        rows_bucket = _round_up(rows_needed, 8)
    rows_bucket = max(rows_bucket, 8)

    f_tile = _pick_f_tile(f_pad)
    rows_tile = _pick_rows_tile(rows_bucket, f_tile, k_dim, groups)
    rows_pad = _round_up(rows_bucket, rows_tile)
    n_slots = rows_pad * groups

    a = jnp.asarray(atomic_numbers).astype(jnp.int32).reshape(-1)
    # Invalid indices and padded slots -> index 118 (an all-zero table row);
    # this also keeps packed groups disjoint in the one-hot.
    a = jnp.where((a >= 0) & (a < VOCAB), a, VOCAB)
    idx = jnp.full((n_slots,), VOCAB, dtype=jnp.int32)
    idx = idx.at[:n_atoms].set(a).reshape(rows_pad, groups)

    out = _atom_embed_padded(idx, table_pad,
                             rows_tile=rows_tile, f_tile=f_tile, groups=groups)

    if groups > 1:
        # Each output row holds G consecutive atoms' embeddings: the reshape
        # is a contiguous row-major view, no feature-axis slice needed.
        out = out.reshape(n_slots, n_features)
        return out if n_slots == n_atoms else out[:n_atoms]
    if n_slots == n_atoms and f_pad == n_features:
        return out
    return out[:n_atoms, :n_features]

    # TODO(synk): scale_grad_by_freq only affects the backward pass; the
    # forward gather implemented here is exact.


if __name__ == "__main__":
    key = jax.random.PRNGKey(0)
    k_table, k_idx_small, k_idx_big, k_table2, k_idx_mid = jax.random.split(key, 5)

    # ----- packed path: n_features = 32 (4 atoms per 128-lane output row) ----
    n_features = 32
    # nn.Embedding default init is N(0, 1).
    table = jax.random.normal(k_table, (VOCAB, n_features), dtype=jnp.float32)
    table_pad = pad_embedding_table(table)       # init-time, not per forward

    atoms_small = jax.random.randint(k_idx_small, (8,), 0, VOCAB, dtype=jnp.int32)
    out_small = jax.block_until_ready(atom_embed(atoms_small, table_pad, n_features))
    assert out_small.shape == (8, n_features)
    assert jnp.allclose(out_small, table[atoms_small], atol=1e-6), "small-case mismatch"

    atoms_big = jax.random.randint(k_idx_big, (300,), 0, VOCAB, dtype=jnp.int32)
    out_big = jax.block_until_ready(atom_embed(atoms_big, table_pad, n_features))
    assert out_big.shape == (300, n_features)
    assert jnp.allclose(out_big, table[atoms_big], atol=1e-6), "packed tiled-case mismatch"

    # ----- unpacked path: n_features = 128 (2 row blocks, no feature slice) --
    n_features2 = 128
    table2 = jax.random.normal(k_table2, (VOCAB, n_features2), dtype=jnp.float32)
    table2_pad = pad_embedding_table(table2)
    atoms_mid = jax.random.randint(k_idx_mid, (20,), 0, VOCAB, dtype=jnp.int32)
    out_mid = jax.block_until_ready(atom_embed(atoms_mid, table2_pad, n_features2))
    assert out_mid.shape == (20, n_features2)
    assert jnp.allclose(out_mid, table2[atoms_mid], atol=1e-6), "unpacked-case mismatch"

    print("KERNEL_OK")
</pallas_src>

<mosaic_0001>
module attributes {stable_mosaic.version = 11 : i64} {
  func.func @_embed_kernel(%arg0: i32, %arg1: i32, %arg2: memref<8x4xi32, #tpu.memory_space<vmem>>, %arg3: memref<512x128xf32, #tpu.memory_space<vmem>>, %arg4: memref<8x128xf32, #tpu.memory_space<vmem>>) attributes {dimension_semantics = [#tpu.dimension_semantics<parallel>, #tpu.dimension_semantics<parallel>], iteration_bounds = array<i64: 1, 1>, scalar_prefetch = 0 : i64, scratch_operands = 0 : i64, tpu.core_type = #tpu.core_type<tc>, window_params = [{transform_indices = @transform_0, window_bounds = array<i64: 8, 4>}, {transform_indices = @transform_1, window_bounds = array<i64: 512, 128>}, {transform_indices = @transform_2, window_bounds = array<i64: 8, 128>}]} {
    %c0 = arith.constant 0 : index
    %c0_0 = arith.constant 0 : index
    %0 = vector.load %arg2[%c0, %c0_0] : memref<8x4xi32, #tpu.memory_space<vmem>>, vector<8x4xi32>
    %1 = tpu.iota {dimensions = array<i32: 1>} : vector<8x512xi32>
    %2 = vector.extract_strided_slice %0 {offsets = [0, 0], sizes = [8, 1], strides = [1, 1]} : vector<8x4xi32> to vector<8x1xi32>
    %3 = vector.broadcast %2 : vector<8x1xi32> to vector<8x512xi32>
    %4 = arith.cmpi eq, %3, %1 : vector<8x512xi32>
    %5 = vector.extract_strided_slice %0 {offsets = [0, 1], sizes = [8, 1], strides = [1, 1]} : vector<8x4xi32> to vector<8x1xi32>
    %c128_i32 = arith.constant 128 : i32
    %6 = vector.broadcast %c128_i32 : i32 to vector<8x1xi32>
    %7 = arith.addi %5, %6 : vector<8x1xi32>
    %8 = vector.broadcast %7 : vector<8x1xi32> to vector<8x512xi32>
    %9 = arith.cmpi eq, %8, %1 : vector<8x512xi32>
    %10 = arith.ori %4, %9 : vector<8x512xi1>
    %11 = vector.extract_strided_slice %0 {offsets = [0, 2], sizes = [8, 1], strides = [1, 1]} : vector<8x4xi32> to vector<8x1xi32>
    %c256_i32 = arith.constant 256 : i32
    %12 = vector.broadcast %c256_i32 : i32 to vector<8x1xi32>
    %13 = arith.addi %11, %12 : vector<8x1xi32>
    %14 = vector.broadcast %13 : vector<8x1xi32> to vector<8x512xi32>
    %15 = arith.cmpi eq, %14, %1 : vector<8x512xi32>
    %16 = arith.ori %10, %15 : vector<8x512xi1>
    %17 = vector.extract_strided_slice %0 {offsets = [0, 3], sizes = [8, 1], strides = [1, 1]} : vector<8x4xi32> to vector<8x1xi32>
    %c384_i32 = arith.constant 384 : i32
    %18 = vector.broadcast %c384_i32 : i32 to vector<8x1xi32>
    %19 = arith.addi %17, %18 : vector<8x1xi32>
    %20 = vector.broadcast %19 : vector<8x1xi32> to vector<8x512xi32>
    %21 = arith.cmpi eq, %20, %1 : vector<8x512xi32>
    %22 = arith.ori %16, %21 : vector<8x512xi1>
    %23 = arith.extui %22 : vector<8x512xi1> to vector<8x512xi32>
    %24 = arith.sitofp %23 : vector<8x512xi32> to vector<8x512xf32>
    %c0_1 = arith.constant 0 : index
    %c0_2 = arith.constant 0 : index
    %25 = vector.load %arg3[%c0_1, %c0_2] : memref<512x128xf32, #tpu.memory_space<vmem>>, vector<512x128xf32>
    %cst = arith.constant dense<0.000000e+00> : vector<8x128xf32>
    %26 = tpu.matmul %24, %25, %cst {dimension_numbers = #tpu.dot_dimension_numbers<[1], [0], [0], [1], [0, 0, 1, 1], [], []>, precision = #tpu.contract_precision<fp32>} : vector<8x512xf32>, vector<512x128xf32>, vector<8x128xf32> -> vector<8x128xf32>
    %c0_3 = arith.constant 0 : index
    %c0_4 = arith.constant 0 : index
    %27 = vector.load %arg4[%c0_3, %c0_4] : memref<8x128xf32, #tpu.memory_space<vmem>>, vector<8x128xf32>
    tpu.vector_store %arg4[%c0_3, %c0_4], %26 {strides = array<i32>} : memref<8x128xf32, #tpu.memory_space<vmem>>, vector<8x128xf32>,
    return
  }
  func.func @transform_0(%arg0: i32, %arg1: i32) -> (i32, i32) {
    %c0_i32 = arith.constant 0 : i32
    %c0_i32_0 = arith.constant 0 : i32
    return %arg1, %c0_i32 : i32, i32
  }
  func.func @transform_1(%arg0: i32, %arg1: i32) -> (i32, i32) {
    %c0_i32 = arith.constant 0 : i32
    %c0_i32_0 = arith.constant 0 : i32
    return %c0_i32, %arg0 : i32, i32
  }
  func.func @transform_2(%arg0: i32, %arg1: i32) -> (i32, i32) {
    %c0_i32 = arith.constant 0 : i32
    return %arg1, %arg0 : i32, i32
  }
}

</mosaic_0001>

<llo_original>
// kernel: _atom_embed_padded.1
$region0: #{_atom_embed_padded.1}
  #allocation0 [shape = 'u32[]', space=smem, size = 0x4, offset = 0x4, fixed_abs, tag = 'smem constant byte address 0x4 - core index']
  #allocation1 [shape = 'u32[72,128]{1,0:T(1,128)}', space=vmem, size = 0x9000, scoped, tag = 'internal scratch']
  %s0 = inlined_call_operand.vmem [shape: s32[8,4], index: 0, kind: input, shape index: {}]
  %s1 = inlined_call_operand.hbm [shape: f32[512,128], index: 1, kind: input, shape index: {}]
  %s2 = inlined_call_operand.hbm [shape: f32[8,128], index: 2, kind: output, shape index: {}]
  %s3 = sld [smem:[#allocation0]]
  $region22: #{_atom_embed_padded.1} parent=0
    _
  %s5 = ssub.s32 1, %s3
  %s6 = scalar_select 0, %s5, %s3
  $region1: #{_atom_embed_padded.1} parent=0
    #allocation2 [shape = 'u8[262144]{0}', space=vmem, size = 0x40000, scoped, tag = 'input window, operand 1, single buffered']
    #allocation3 [shape = 's32[1]{0}', space=sflag, size = 0x4, scoped, tag = 'scoped memory for _atom_embed_padded.1']
    #allocation4 [shape = 's32[1]{0}', space=sflag, size = 0x4, scoped, tag = 'scoped memory for _atom_embed_padded.1']
    #allocation5 [shape = 'u8[4096]{0}', space=vmem, size = 0x1000, scoped, tag = 'output window, operand 0, single buffered']
    %7 = vsyncpa [#allocation3], 0
    %8 = vsyncpa [#allocation4], 0
    // Predicated region
    $region2: #{_atom_embed_padded.1} parent=1 // pred_check
      _
    $region3: #{_atom_embed_padded.1} parent=1 // pred_check_branch
      %10 = sbr.rel (0) target = $region5
    $region4: #{_atom_embed_padded.1} parent=1 // pred_region
      _
    $region5: #{_atom_embed_padded.1} parent=1 // pred_fallthru
      _
    // Predicated region
    $region6: #{_atom_embed_padded.1} parent=1 // pred_check
      _
    $region7: #{_atom_embed_padded.1} parent=1 // pred_check_branch
      %12 = sbr.rel (0) target = $region9
    $region8: #{_atom_embed_padded.1} parent=1 // pred_region
      %14 = vsyncadd [#allocation3], 0
      %s15 = sshll.u32 %s1, 4
      %s16 = int_to_ptr.hbm [resolvable:$true] %s15
      %s17 = sshll.u32 [#allocation2], 4
      %s18 = int_to_ptr.vmem [resolvable:$true] %s17
      %23 = dma.hbm_to_vmem [thread:$0]  %s16, 8192, %s18, [#allocation3], 128, 128, 8
    $region9: #{_atom_embed_padded.1} parent=1 // pred_fallthru
      _
    // Predicated region
    $region10: #{_atom_embed_padded.1} parent=1 // pred_check
      _
    $region11: #{_atom_embed_padded.1} parent=1 // pred_check_branch
      %25 = sbr.rel (0) target = $region13
    $region12: #{_atom_embed_padded.1} parent=1 // pred_region
      %27 = dma.done [#allocation3], 8192
    $region13: #{_atom_embed_padded.1} parent=1 // pred_fallthru
      _
    %v28 = vld [vmem:[%s0] sm:$0xff]
    %v29 = vlaneseq
    %v30 = vand.u32 %v29, 127
    %v31 = vadd.s32 %v30, 128
    %v32 = vadd.s32 %v30, 256
    %v33 = vadd.s32 %v30, 384
    %34 = vset.pattern.permute.xlu0 0
    %35 = vperm.xlu0 %34, %v28
    %v36 = vpop.permute.xlu0 %35
    %vm37 = vcmp.eq.s32.totalorder %v36, %v30
    %vm38 = vcmp.eq.s32.totalorder %v36, %v31
    %vm39 = vcmp.eq.s32.totalorder %v36, %v32
    %vm40 = vcmp.eq.s32.totalorder %v36, %v33
    %v41 = vadd.s32 %v28, 128
    %42 = vset.pattern.permute.xlu0 1
    %43 = vperm.xlu0 %42, %v41
    %v44 = vpop.permute.xlu0 %43
    %vm45 = vcmp.eq.s32.totalorder %v44, %v30
    %vm46 = vcmp.eq.s32.totalorder %v44, %v31
    %vm47 = vcmp.eq.s32.totalorder %v44, %v32
    %vm48 = vcmp.eq.s32.totalorder %v44, %v33
    %vm49 = vmor %vm37, %vm45
    %vm50 = vmor %vm38, %vm46
    %vm51 = vmor %vm39, %vm47
    %vm52 = vmor %vm40, %vm48
    %v53 = vadd.s32 %v28, 256
    %54 = vset.pattern.permute.xlu0 2
    %55 = vperm.xlu0 %54, %v53
    %v56 = vpop.permute.xlu0 %55
    %vm57 = vcmp.eq.s32.totalorder %v56, %v30
    %vm58 = vcmp.eq.s32.totalorder %v56, %v31
    %vm59 = vcmp.eq.s32.totalorder %v56, %v32
    %vm60 = vcmp.eq.s32.totalorder %v56, %v33
    %vm61 = vmor %vm49, %vm57
    %vm62 = vmor %vm50, %vm58
    %vm63 = vmor %vm51, %vm59
    %vm64 = vmor %vm52, %vm60
    %v65 = vadd.s32 %v28, 384
    %66 = vset.pattern.permute.xlu0 3
    %67 = vperm.xlu0 %66, %v65
    %v68 = vpop.permute.xlu0 %67
    %vm69 = vcmp.eq.s32.totalorder %v68, %v30
    %vm70 = vcmp.eq.s32.totalorder %v68, %v31
    %vm71 = vcmp.eq.s32.totalorder %v68, %v32
    %vm72 = vcmp.eq.s32.totalorder %v68, %v33
    %vm73 = vmor %vm61, %vm69
    %vm74 = vmor %vm62, %vm70
    %vm75 = vmor %vm63, %vm71
    %vm76 = vmor %vm64, %vm72
    %v77 = vsel %vm73, 1, 0
    %v78 = vsel %vm74, 1, 0
    %v79 = vsel %vm75, 1, 0
    %v80 = vsel %vm76, 1, 0
    %v81 = vcvt.s32.f32 %v77
    %v82 = vcvt.s32.f32 %v78
    %v83 = vcvt.s32.f32 %v79
    %v84 = vcvt.s32.f32 %v80
    %v85 = vld [vmem:[#allocation2] sm:$0xff]
    %v86 = vld [vmem:[#allocation2 + $0x8] sm:$0xff]
    %v87 = vld [vmem:[#allocation2 + $0x10] sm:$0xff]
    %v88 = vld [vmem:[#allocation2 + $0x18] sm:$0xff]
    %v89 = vld [vmem:[#allocation2 + $0x20] sm:$0xff]
    %v90 = vld [vmem:[#allocation2 + $0x28] sm:$0xff]
    %v91 = vld [vmem:[#allocation2 + $0x30] sm:$0xff]
    %v92 = vld [vmem:[#allocation2 + $0x38] sm:$0xff]
    %v93 = vld [vmem:[#allocation2 + $0x40] sm:$0xff]
    %v94 = vld [vmem:[#allocation2 + $0x48] sm:$0xff]
    %v95 = vld [vmem:[#allocation2 + $0x50] sm:$0xff]
    %v96 = vld [vmem:[#allocation2 + $0x58] sm:$0xff]
    %v97 = vld [vmem:[#allocation2 + $0x60] sm:$0xff]
    %v98 = vld [vmem:[#allocation2 + $0x68] sm:$0xff]
    %v99 = vld [vmem:[#allocation2 + $0x70] sm:$0xff]
    %v100 = vld [vmem:[#allocation2 + $0x78] sm:$0xff]
    %v101 = vld [vmem:[#allocation2 + $0x80] sm:$0xff]
    %v102 = vld [vmem:[#allocation2 + $0x88] sm:$0xff]
    %v103 = vld [vmem:[#allocation2 + $0x90] sm:$0xff]
    %v104 = vld [vmem:[#allocation2 + $0x98] sm:$0xff]
    %v105 = vld [vmem:[#allocation2 + $0xa0] sm:$0xff]
    %v106 = vld [vmem:[#allocation2 + $0xa8] sm:$0xff]
    %v107 = vld [vmem:[#allocation2 + $0xb0] sm:$0xff]
    %v108 = vld [vmem:[#allocation2 + $0xb8] sm:$0xff]
    %v109 = vld [vmem:[#allocation2 + $0xc0] sm:$0xff]
    %v110 = vld [vmem:[#allocation2 + $0xc8] sm:$0xff]
    %v111 = vld [vmem:[#allocation2 + $0xd0] sm:$0xff]
    %v112 = vld [vmem:[#allocation2 + $0xd8] sm:$0xff]
    %v113 = vld [vmem:[#allocation2 + $0xe0] sm:$0xff]
    %v114 = vld [vmem:[#allocation2 + $0xe8] sm:$0xff]
    %v115 = vld [vmem:[#allocation2 + $0xf0] sm:$0xff]
    %v116 = vld [vmem:[#allocation2 + $0xf8] sm:$0xff]
    %v117 = vld [vmem:[#allocation2 + $0x100] sm:$0xff]
    %v118 = vld [vmem:[#allocation2 + $0x108] sm:$0xff]
    %v119 = vld [vmem:[#allocation2 + $0x110] sm:$0xff]
    %v120 = vld [vmem:[#allocation2 + $0x118] sm:$0xff]
    %v121 = vld [vmem:[#allocation2 + $0x120] sm:$0xff]
    %v122 = vld [vmem:[#allocation2 + $0x128] sm:$0xff]
    %v123 = vld [vmem:[#allocation2 + $0x130] sm:$0xff]
    %v124 = vld [vmem:[#allocation2 + $0x138] sm:$0xff]
    %v125 = vld [vmem:[#allocation2 + $0x140] sm:$0xff]
    %v126 = vld [vmem:[#allocation2 + $0x148] sm:$0xff]
    %v127 = vld [vmem:[#allocation2 + $0x150] sm:$0xff]
    %v128 = vld [vmem:[#allocation2 + $0x158] sm:$0xff]
    %v129 = vld [vmem:[#allocation2 + $0x160] sm:$0xff]
    %v130 = vld [vmem:[#allocation2 + $0x168] sm:$0xff]
    %v131 = vld [vmem:[#allocation2 + $0x170] sm:$0xff]
    %v132 = vld [vmem:[#allocation2 + $0x178] sm:$0xff]
    %v133 = vld [vmem:[#allocation2 + $0x180] sm:$0xff]
    %v134 = vld [vmem:[#allocation2 + $0x188] sm:$0xff]
    %v135 = vld [vmem:[#allocation2 + $0x190] sm:$0xff]
    %v136 = vld [vmem:[#allocation2 + $0x198] sm:$0xff]
    %v137 = vld [vmem:[#allocation2 + $0x1a0] sm:$0xff]
    %v138 = vld [vmem:[#allocation2 + $0x1a8] sm:$0xff]
    %v139 = vld [vmem:[#allocation2 + $0x1b0] sm:$0xff]
    %v140 = vld [vmem:[#allocation2 + $0x1b8] sm:$0xff]
    %v141 = vld [vmem:[#allocation2 + $0x1c0] sm:$0xff]
    %v142 = vld [vmem:[#allocation2 + $0x1c8] sm:$0xff]
    %v143 = vld [vmem:[#allocation2 + $0x1d0] sm:$0xff]
    %v144 = vld [vmem:[#allocation2 + $0x1d8] sm:$0xff]
    %v145 = vld [vmem:[#allocation2 + $0x1e0] sm:$0xff]
    %v146 = vld [vmem:[#allocation2 + $0x1e8] sm:$0xff]
    %v147 = vld [vmem:[#allocation2 + $0x1f0] sm:$0xff]
    %v148 = vld [vmem:[#allocation2 + $0x1f8] sm:$0xff]
    %v149 = vand.u32 %v100, 4294901760
    %150 = vmatpush.msra.mxu0 %v149
    %v151 = vand.u32 %v99, 4294901760
    %152 = vmatpush.msra.mxu0 %v151
    %v153 = vand.u32 %v98, 4294901760
    %154 = vmatpush.msra.mxu0 %v153
    %v155 = vand.u32 %v97, 4294901760
    %156 = vmatpush.msra.mxu0 %v155
    %v157 = vand.u32 %v96, 4294901760
    %158 = vmatpush.msra.mxu0 %v157
    %v159 = vand.u32 %v95, 4294901760
    %160 = vmatpush.msra.mxu0 %v159
    %v161 = vand.u32 %v94, 4294901760
    %162 = vmatpush.msra.mxu0 %v161
    %v163 = vand.u32 %v93, 4294901760
    %164 = vmatpush.msra.mxu0 %v163
    %v165 = vand.u32 %v92, 4294901760
    %166 = vmatpush.msra.mxu0 %v165
    %v167 = vand.u32 %v91, 4294901760
    %168 = vmatpush.msra.mxu0 %v167
    %v169 = vand.u32 %v90, 4294901760
    %170 = vmatpush.msra.mxu0 %v169
    %v171 = vand.u32 %v89, 4294901760
    %172 = vmatpush.msra.mxu0 %v171
    %v173 = vand.u32 %v88, 4294901760
    %174 = vmatpush.msra.mxu0 %v173
    %v175 = vand.u32 %v87, 4294901760
    %176 = vmatpush.msra.mxu0 %v175
    %v177 = vand.u32 %v86, 4294901760
    %178 = vmatpush.msra.mxu0 %v177
    %v179 = vand.u32 %v85, 4294901760
    %180 = vmatpush.msra.mxu0 %v179
    %v181 = vand.u32 %v81, 4294901760
    %v182 = vsub.f32 %v81, %v181
    %v183 = vand.u32 %v182, 4294901760
    %v184 = vsub.f32 %v182, %v183
    %v185 = vand.u32 %v184, 4294901760
    %186 = vmatmul.f32.gmra.mxu0 %v185
    %v187 = vpop.f32.mrf.mxu0
    %v188 = vadd.f32 0.0, %v187
    %189 = vdwg.mxu0
    %v190 = vand.u32 %v100, 4294901760
    %v191 = vsub.f32 %v100, %v190
    %v192 = vand.u32 %v191, 4294901760
    %v193 = vsub.f32 %v191, %v192
    %v194 = vand.u32 %v193, 4294901760
    %195 = vmatpush.msra.mxu0 %v194
    %v196 = vand.u32 %v99, 4294901760
    %v197 = vsub.f32 %v99, %v196
    %v198 = vand.u32 %v197, 4294901760
    %v199 = vsub.f32 %v197, %v198
    %v200 = vand.u32 %v199, 4294901760
    %201 = vmatpush.msra.mxu0 %v200
    %v202 = vand.u32 %v98, 4294901760
    %v203 = vsub.f32 %v98, %v202
    %v204 = vand.u32 %v203, 4294901760
    %v205 = vsub.f32 %v203, %v204
    %v206 = vand.u32 %v205, 4294901760
    %207 = vmatpush.msra.mxu0 %v206
    %v208 = vand.u32 %v97, 4294901760
    %v209 = vsub.f32 %v97, %v208
    %v210 = vand.u32 %v209, 4294901760
    %v211 = vsub.f32 %v209, %v210
    %v212 = vand.u32 %v211, 4294901760
    %213 = vmatpush.msra.mxu0 %v212
    %v214 = vand.u32 %v96, 4294901760
    %v215 = vsub.f32 %v96, %v214
    %v216 = vand.u32 %v215, 4294901760
    %v217 = vsub.f32 %v215, %v216
    %v218 = vand.u32 %v217, 4294901760
    %219 = vmatpush.msra.mxu0 %v218
    %v220 = vand.u32 %v95, 4294901760
    %v221 = vsub.f32 %v95, %v220
    %v222 = vand.u32 %v221, 4294901760
    %v223 = vsub.f32 %v221, %v222
    %v224 = vand.u32 %v223, 4294901760
    %225 = vmatpush.msra.mxu0 %v224
    %v226 = vand.u32 %v94, 4294901760
    %v227 = vsub.f32 %v94, %v226
    %v228 = vand.u32 %v227, 4294901760
    %v229 = vsub.f32 %v227, %v228
    %v230 = vand.u32 %v229, 4294901760
    %231 = vmatpush.msra.mxu0 %v230
    %v232 = vand.u32 %v93, 4294901760
    %v233 = vsub.f32 %v93, %v232
    %v234 = vand.u32 %v233, 4294901760
    %v235 = vsub.f32 %v233, %v234
    %v236 = vand.u32 %v235, 4294901760
    %237 = vmatpush.msra.mxu0 %v236
    %v238 = vand.u32 %v92, 4294901760
    %v239 = vsub.f32 %v92, %v238
    %v240 = vand.u32 %v239, 4294901760
    %v241 = vsub.f32 %v239, %v240
    %v242 = vand.u32 %v241, 4294901760
    %243 = vmatpush.msra.mxu0 %v242
    %v244 = vand.u32 %v91, 4294901760
    %v245 = vsub.f32 %v91, %v244
    %v246 = vand.u32 %v245, 4294901760
    %v247 = vsub.f32 %v245, %v246
    %v248 = vand.u32 %v247, 4294901760
    %249 = vmatpush.msra.mxu0 %v248
    %v250 = vand.u32 %v90, 4294901760
    %v251 = vsub.f32 %v90, %v250
    %v252 = vand.u32 %v251, 4294901760
    %v253 = vsub.f32 %v251, %v252
    %v254 = vand.u32 %v253, 4294901760
    %255 = vmatpush.msra.mxu0 %v254
    %v256 = vand.u32 %v89, 4294901760
    %v257 = vsub.f32 %v89, %v256
    %v258 = vand.u32 %v257, 4294901760
    %v259 = vsub.f32 %v257, %v258
    %v260 = vand.u32 %v259, 4294901760
    %261 = vmatpush.msra.mxu0 %v260
    %v262 = vand.u32 %v88, 4294901760
    %v263 = vsub.f32 %v88, %v262
    %v264 = vand.u32 %v263, 4294901760
    %v265 = vsub.f32 %v263, %v264
    %v266 = vand.u32 %v265, 4294901760
    %267 = vmatpush.msra.mxu0 %v266
    %v268 = vand.u32 %v87, 4294901760
    %v269 = vsub.f32 %v87, %v268
    %v270 = vand.u32 %v269, 4294901760
    %v271 = vsub.f32 %v269, %v270
    %v272 = vand.u32 %v271, 4294901760
    %273 = vmatpush.msra.mxu0 %v272
    %v274 = vand.u32 %v86, 4294901760
    %v275 = vsub.f32 %v86, %v274
    %v276 = vand.u32 %v275, 4294901760
    %v277 = vsub.f32 %v275, %v276
    %v278 = vand.u32 %v277, 4294901760
    %279 = vmatpush.msra.mxu0 %v278
    %v280 = vand.u32 %v85, 4294901760
    %v281 = vsub.f32 %v85, %v280
    %v282 = vand.u32 %v281, 4294901760
    %v283 = vsub.f32 %v281, %v282
    %v284 = vand.u32 %v283, 4294901760
    %285 = vmatpush.msra.mxu0 %v284
    %v286 = vand.u32 %v81, 4294901760
    %287 = vmatmul.f32.gmra.mxu0 %v286
    %v288 = vpop.f32.mrf.mxu0
    %v289 = vadd.f32 %v188, %v288
    %290 = vdwg.mxu0
    %v291 = vand.u32 %v100, 4294901760
    %v292 = vsub.f32 %v100, %v291
    %293 = vmatpush.msra.mxu0 %v292
    %v294 = vand.u32 %v99, 4294901760
    %v295 = vsub.f32 %v99, %v294
    %296 = vmatpush.msra.mxu0 %v295
    %v297 = vand.u32 %v98, 4294901760
    %v298 = vsub.f32 %v98, %v297
    %299 = vmatpush.msra.mxu0 %v298
    %v300 = vand.u32 %v97, 4294901760
    %v301 = vsub.f32 %v97, %v300
    %302 = vmatpush.msra.mxu0 %v301
    %v303 = vand.u32 %v96, 4294901760
    %v304 = vsub.f32 %v96, %v303
    %305 = vmatpush.msra.mxu0 %v304
    %v306 = vand.u32 %v95, 4294901760
    %v307 = vsub.f32 %v95, %v306
    %308 = vmatpush.msra.mxu0 %v307
    %v309 = vand.u32 %v94, 4294901760
    %v310 = vsub.f32 %v94, %v309
    %311 = vmatpush.msra.mxu0 %v310
    %v312 = vand.u32 %v93, 4294901760
    %v313 = vsub.f32 %v93, %v312
    %314 = vmatpush.msra.mxu0 %v313
    %v315 = vand.u32 %v92, 4294901760
    %v316 = vsub.f32 %v92, %v315
    %317 = vmatpush.msra.mxu0 %v316
    %v318 = vand.u32 %v91, 4294901760
    %v319 = vsub.f32 %v91, %v318
    %320 = vmatpush.msra.mxu0 %v319
    %v321 = vand.u32 %v90, 4294901760
    %v322 = vsub.f32 %v90, %v321
    %323 = vmatpush.msra.mxu0 %v322
    %v324 = vand.u32 %v89, 4294901760
    %v325 = vsub.f32 %v89, %v324
    %326 = vmatpush.msra.mxu0 %v325
    %v327 = vand.u32 %v88, 4294901760
    %v328 = vsub.f32 %v88, %v327
    %329 = vmatpush.msra.mxu0 %v328
    %v330 = vand.u32 %v87, 4294901760
    %v331 = vsub.f32 %v87, %v330
    %332 = vmatpush.msra.mxu0 %v331
    %v333 = vand.u32 %v86, 4294901760
    %v334 = vsub.f32 %v86, %v333
    %335 = vmatpush.msra.mxu0 %v334
    %v336 = vand.u32 %v85, 4294901760
    %v337 = vsub.f32 %v85, %v336
    %338 = vmatpush.msra.mxu0 %v337
    %v339 = vand.u32 %v81, 4294901760
    %v340 = vsub.f32 %v81, %v339
    %341 = vmatmul.f32.gmra.mxu0 %v340
    %v342 = vpop.f32.mrf.mxu0
    %v343 = vadd.f32 %v289, %v342
    %344 = vdwg.mxu0
    %v345 = vand.u32 %v100, 4294901760
    %346 = vmatpush.msra.mxu0 %v345
    %v347 = vand.u32 %v99, 4294901760
    %348 = vmatpush.msra.mxu0 %v347
    %v349 = vand.u32 %v98, 4294901760
    %350 = vmatpush.msra.mxu0 %v349
    %v351 = vand.u32 %v97, 4294901760
    %352 = vmatpush.msra.mxu0 %v351
    %v353 = vand.u32 %v96, 4294901760
    %354 = vmatpush.msra.mxu0 %v353
    %v355 = vand.u32 %v95, 4294901760
    %356 = vmatpush.msra.mxu0 %v355
    %v357 = vand.u32 %v94, 4294901760
    %358 = vmatpush.msra.mxu0 %v357
    %v359 = vand.u32 %v93, 4294901760
    %360 = vmatpush.msra.mxu0 %v359
    %v361 = vand.u32 %v92, 4294901760
    %362 = vmatpush.msra.mxu0 %v361
    %v363 = vand.u32 %v91, 4294901760
    %364 = vmatpush.msra.mxu0 %v363
    %v365 = vand.u32 %v90, 4294901760
    %366 = vmatpush.msra.mxu0 %v365
    %v367 = vand.u32 %v89, 4294901760
    %368 = vmatpush.msra.mxu0 %v367
    %v369 = vand.u32 %v88, 4294901760
    %370 = vmatpush.msra.mxu0 %v369
    %v371 = vand.u32 %v87, 4294901760
    %372 = vmatpush.msra.mxu0 %v371
    %v373 = vand.u32 %v86, 4294901760
    %374 = vmatpush.msra.mxu0 %v373
    %v375 = vand.u32 %v85, 4294901760
    %376 = vmatpush.msra.mxu0 %v375
    %v377 = vand.u32 %v81, 4294901760
    %v378 = vsub.f32 %v81, %v377
    %v379 = vand.u32 %v378, 4294901760
    %380 = vmatmul.f32.gmra.mxu0 %v379
    %v381 = vpop.f32.mrf.mxu0
    %v382 = vadd.f32 %v343, %v381
    %383 = vdwg.mxu0
    %v384 = vand.u32 %v100, 4294901760
    %v385 = vsub.f32 %v100, %v384
    %v386 = vand.u32 %v385, 4294901760
    %387 = vmatpush.msra.mxu0 %v386
    %v388 = vand.u32 %v99, 4294901760
    %v389 = vsub.f32 %v99, %v388
    %v390 = vand.u32 %v389, 4294901760
    %391 = vmatpush.msra.mxu0 %v390
    %v392 = vand.u32 %v98, 4294901760
    %v393 = vsub.f32 %v98, %v392
    %v394 = vand.u32 %v393, 4294901760
    %395 = vmatpush.msra.mxu0 %v394
    %v396 = vand.u32 %v97, 4294901760
    %v397 = vsub.f32 %v97, %v396
    %v398 = vand.u32 %v397, 4294901760
    %399 = vmatpush.msra.mxu0 %v398
    %v400 = vand.u32 %v96, 4294901760
    %v401 = vsub.f32 %v96, %v400
    %v402 = vand.u32 %v401, 4294901760
    %403 = vmatpush.msra.mxu0 %v402
    %v404 = vand.u32 %v95, 4294901760
    %v405 = vsub.f32 %v95, %v404
    %v406 = vand.u32 %v405, 4294901760
    %407 = vmatpush.msra.mxu0 %v406
    %v408 = vand.u32 %v94, 4294901760
    %v409 = vsub.f32 %v94, %v408
    %v410 = vand.u32 %v409, 4294901760
    %411 = vmatpush.msra.mxu0 %v410
    %v412 = vand.u32 %v93, 4294901760
    %v413 = vsub.f32 %v93, %v412
    %v414 = vand.u32 %v413, 4294901760
    %415 = vmatpush.msra.mxu0 %v414
    %v416 = vand.u32 %v92, 4294901760
    %v417 = vsub.f32 %v92, %v416
    %v418 = vand.u32 %v417, 4294901760
    %419 = vmatpush.msra.mxu0 %v418
    %v420 = vand.u32 %v91, 4294901760
    %v421 = vsub.f32 %v91, %v420
    %v422 = vand.u32 %v421, 4294901760
    %423 = vmatpush.msra.mxu0 %v422
    %v424 = vand.u32 %v90, 4294901760
    %v425 = vsub.f32 %v90, %v424
    %v426 = vand.u32 %v425, 4294901760
    %427 = vmatpush.msra.mxu0 %v426
    %v428 = vand.u32 %v89, 4294901760
    %v429 = vsub.f32 %v89, %v428
    %v430 = vand.u32 %v429, 4294901760
    %431 = vmatpush.msra.mxu0 %v430
    %v432 = vand.u32 %v88, 4294901760
    %v433 = vsub.f32 %v88, %v432
    %v434 = vand.u32 %v433, 4294901760
    %435 = vmatpush.msra.mxu0 %v434
    %v436 = vand.u32 %v87, 4294901760
    %v437 = vsub.f32 %v87, %v436
    %v438 = vand.u32 %v437, 4294901760
    %439 = vmatpush.msra.mxu0 %v438
    %v440 = vand.u32 %v86, 4294901760
    %v441 = vsub.f32 %v86, %v440
    %v442 = vand.u32 %v441, 4294901760
    %443 = vmatpush.msra.mxu0 %v442
    %v444 = vand.u32 %v85, 4294901760
    %v445 = vsub.f32 %v85, %v444
    %v446 = vand.u32 %v445, 4294901760
    %447 = vmatpush.msra.mxu0 %v446
    %v448 = vand.u32 %v81, 4294901760
    %449 = vmatmul.f32.gmra.mxu0 %v448
    %v450 = vpop.f32.mrf.mxu0
    %v451 = vadd.f32 %v382, %v450
    %452 = vdwg.mxu0
    %v453 = vand.u32 %v100, 4294901760
    %454 = vmatpush.msra.mxu0 %v453
    %v455 = vand.u32 %v99, 4294901760
    %456 = vmatpush.msra.mxu0 %v455
    %v457 = vand.u32 %v98, 4294901760
    %458 = vmatpush.msra.mxu0 %v457
    %v459 = vand.u32 %v97, 4294901760
    %460 = vmatpush.msra.mxu0 %v459
    %v461 = vand.u32 %v96, 4294901760
    %462 = vmatpush.msra.mxu0 %v461
    %v463 = vand.u32 %v95, 4294901760
    %464 = vmatpush.msra.mxu0 %v463
    %v465 = vand.u32 %v94, 4294901760
    %466 = vmatpush.msra.mxu0 %v465
    %v467 = vand.u32 %v93, 4294901760
    %468 = vmatpush.msra.mxu0 %v467
    %v469 = vand.u32 %v92, 4294901760
    %470 = vmatpush.msra.mxu0 %v469
    %v471 = vand.u32 %v91, 4294901760
    %472 = vmatpush.msra.mxu0 %v471
    %v473 = vand.u32 %v90, 4294901760
    %474 = vmatpush.msra.mxu0 %v473
    %v475 = vand.u32 %v89, 4294901760
    %476 = vmatpush.msra.mxu0 %v475
    %v477 = vand.u32 %v88, 4294901760
    %478 = vmatpush.msra.mxu0 %v477
    %v479 = vand.u32 %v87, 4294901760
    %480 = vmatpush.msra.mxu0 %v479
    %v481 = vand.u32 %v86, 4294901760
    %482 = vmatpush.msra.mxu0 %v481
    %v483 = vand.u32 %v85, 4294901760
    %484 = vmatpush.msra.mxu0 %v483
    %v485 = vand.u32 %v81, 4294901760
    %486 = vmatmul.f32.gmra.mxu0 %v485
    %v487 = vpop.f32.mrf.mxu0
    %v488 = vadd.f32 %v451, %v487
    %489 = vdwg.mxu0
    %v490 = vand.u32 %v116, 4294901760
    %491 = vmatpush.msra.mxu0 %v490
    %v492 = vand.u32 %v115, 4294901760
    %493 = vmatpush.msra.mxu0 %v492
    %v494 = vand.u32 %v114, 4294901760
    %495 = vmatpush.msra.mxu0 %v494
    %v496 = vand.u32 %v113, 4294901760
    %497 = vmatpush.msra.mxu0 %v496
    %v498 = vand.u32 %v112, 4294901760
    %499 = vmatpush.msra.mxu0 %v498
    %v500 = vand.u32 %v111, 4294901760
    %501 = vmatpush.msra.mxu0 %v500
    %v502 = vand.u32 %v110, 4294901760
    %503 = vmatpush.msra.mxu0 %v502
    %v504 = vand.u32 %v109, 4294901760
    %505 = vmatpush.msra.mxu0 %v504
    %v506 = vand.u32 %v108, 4294901760
    %507 = vmatpush.msra.mxu0 %v506
    %v508 = vand.u32 %v107, 4294901760
    %509 = vmatpush.msra.mxu0 %v508
    %v510 = vand.u32 %v106, 4294901760
    %511 = vmatpush.msra.mxu0 %v510
    %v512 = vand.u32 %v105, 4294901760
    %513 = vmatpush.msra.mxu0 %v512
    %v514 = vand.u32 %v104, 4294901760
    %515 = vmatpush.msra.mxu0 %v514
    %v516 = vand.u32 %v103, 4294901760
    %517 = vmatpush.msra.mxu0 %v516
    %v518 = vand.u32 %v102, 4294901760
    %519 = vmatpush.msra.mxu0 %v518
    %v520 = vand.u32 %v101, 4294901760
    %521 = vmatpush.msra.mxu0 %v520
    %v522 = vand.u32 %v82, 4294901760
    %v523 = vsub.f32 %v82, %v522
    %v524 = vand.u32 %v523, 4294901760
    %v525 = vsub.f32 %v523, %v524
    %v526 = vand.u32 %v525, 4294901760
    %527 = vmatmul.f32.gmra.mxu0 %v526
    %v528 = vpop.f32.mrf.mxu0
    %v529 = vadd.f32 %v488, %v528
    %530 = vdwg.mxu0
    %v531 = vand.u32 %v116, 4294901760
    %v532 = vsub.f32 %v116, %v531
    %v533 = vand.u32 %v532, 4294901760
    %v534 = vsub.f32 %v532, %v533
    %v535 = vand.u32 %v534, 4294901760
    %536 = vmatpush.msra.mxu0 %v535
    %v537 = vand.u32 %v115, 4294901760
    %v538 = vsub.f32 %v115, %v537
    %v539 = vand.u32 %v538, 4294901760
    %v540 = vsub.f32 %v538, %v539
    %v541 = vand.u32 %v540, 4294901760
    %542 = vmatpush.msra.mxu0 %v541
    %v543 = vand.u32 %v114, 4294901760
    %v544 = vsub.f32 %v114, %v543
    %v545 = vand.u32 %v544, 4294901760
    %v546 = vsub.f32 %v544, %v545
    %v547 = vand.u32 %v546, 4294901760
    %548 = vmatpush.msra.mxu0 %v547
    %v549 = vand.u32 %v113, 4294901760
    %v550 = vsub.f32 %v113, %v549
    %v551 = vand.u32 %v550, 4294901760
    %v552 = vsub.f32 %v550, %v551
    %v553 = vand.u32 %v552, 4294901760
    %554 = vmatpush.msra.mxu0 %v553
    %v555 = vand.u32 %v112, 4294901760
    %v556 = vsub.f32 %v112, %v555
    %v557 = vand.u32 %v556, 4294901760
    %v558 = vsub.f32 %v556, %v557
    %v559 = vand.u32 %v558, 4294901760
    %560 = vmatpush.msra.mxu0 %v559
    %v561 = vand.u32 %v111, 4294901760
    %v562 = vsub.f32 %v111, %v561
    %v563 = vand.u32 %v562, 4294901760
    %v564 = vsub.f32 %v562, %v563
    %v565 = vand.u32 %v564, 4294901760
    %566 = vmatpush.msra.mxu0 %v565
    %v567 = vand.u32 %v110, 4294901760
    %v568 = vsub.f32 %v110, %v567
    %v569 = vand.u32 %v568, 4294901760
    %v570 = vsub.f32 %v568, %v569
    %v571 = vand.u32 %v570, 4294901760
    %572 = vmatpush.msra.mxu0 %v571
    %v573 = vand.u32 %v109, 4294901760
    %v574 = vsub.f32 %v109, %v573
    %v575 = vand.u32 %v574, 4294901760
    %v576 = vsub.f32 %v574, %v575
    %v577 = vand.u32 %v576, 4294901760
    %578 = vmatpush.msra.mxu0 %v577
    %v579 = vand.u32 %v108, 4294901760
    %v580 = vsub.f32 %v108, %v579
    %v581 = vand.u32 %v580, 4294901760
    %v582 = vsub.f32 %v580, %v581
    %v583 = vand.u32 %v582, 4294901760
    %584 = vmatpush.msra.mxu0 %v583
    %v585 = vand.u32 %v107, 4294901760
    %v586 = vsub.f32 %v107, %v585
    %v587 = vand.u32 %v586, 4294901760
    %v588 = vsub.f32 %v586, %v587
    %v589 = vand.u32 %v588, 4294901760
    %590 = vmatpush.msra.mxu0 %v589
    %v591 = vand.u32 %v106, 4294901760
    %v592 = vsub.f32 %v106, %v591
    %v593 = vand.u32 %v592, 4294901760
    %v594 = vsub.f32 %v592, %v593
    %v595 = vand.u32 %v594, 4294901760
    %596 = vmatpush.msra.mxu0 %v595
    %v597 = vand.u32 %v105, 4294901760
    %v598 = vsub.f32 %v105, %v597
    %v599 = vand.u32 %v598, 4294901760
    %v600 = vsub.f32 %v598, %v599
    %v601 = vand.u32 %v600, 4294901760
    %602 = vmatpush.msra.mxu0 %v601
    %v603 = vand.u32 %v104, 4294901760
    %v604 = vsub.f32 %v104, %v603
    %v605 = vand.u32 %v604, 4294901760
    %v606 = vsub.f32 %v604, %v605
    %v607 = vand.u32 %v606, 4294901760
    %608 = vmatpush.msra.mxu0 %v607
    %v609 = vand.u32 %v103, 4294901760
    %v610 = vsub.f32 %v103, %v609
    %v611 = vand.u32 %v610, 4294901760
    %v612 = vsub.f32 %v610, %v611
    %v613 = vand.u32 %v612, 4294901760
    %614 = vmatpush.msra.mxu0 %v613
    %v615 = vand.u32 %v102, 4294901760
    %v616 = vsub.f32 %v102, %v615
    %v617 = vand.u32 %v616, 4294901760
    %v618 = vsub.f32 %v616, %v617
    %v619 = vand.u32 %v618, 4294901760
    %620 = vmatpush.msra.mxu0 %v619
    %v621 = vand.u32 %v101, 4294901760
    %v622 = vsub.f32 %v101, %v621
    %v623 = vand.u32 %v622, 4294901760
    %v624 = vsub.f32 %v622, %v623
    %v625 = vand.u32 %v624, 4294901760
    %626 = vmatpush.msra.mxu0 %v625
    %v627 = vand.u32 %v82, 4294901760
    %628 = vmatmul.f32.gmra.mxu0 %v627
    %v629 = vpop.f32.mrf.mxu0
    %v630 = vadd.f32 %v529, %v629
    %631 = vdwg.mxu0
    %v632 = vand.u32 %v116, 4294901760
    %v633 = vsub.f32 %v116, %v632
    %634 = vmatpush.msra.mxu0 %v633
    %v635 = vand.u32 %v115, 4294901760
    %v636 = vsub.f32 %v115, %v635
    %637 = vmatpush.msra.mxu0 %v636
    %v638 = vand.u32 %v114, 4294901760
    %v639 = vsub.f32 %v114, %v638
    %640 = vmatpush.msra.mxu0 %v639
    %v641 = vand.u32 %v113, 4294901760
    %v642 = vsub.f32 %v113, %v641
    %643 = vmatpush.msra.mxu0 %v642
    %v644 = vand.u32 %v112, 4294901760
    %v645 = vsub.f32 %v112, %v644
    %646 = vmatpush.msra.mxu0 %v645
    %v647 = vand.u32 %v111, 4294901760
    %v648 = vsub.f32 %v111, %v647
    %649 = vmatpush.msra.mxu0 %v648
    %v650 = vand.u32 %v110, 4294901760
    %v651 = vsub.f32 %v110, %v650
    %652 = vmatpush.msra.mxu0 %v651
    %v653 = vand.u32 %v109, 4294901760
    %v654 = vsub.f32 %v109, %v653
    %655 = vmatpush.msra.mxu0 %v654
    %v656 = vand.u32 %v108, 4294901760
    %v657 = vsub.f32 %v108, %v656
    %658 = vmatpush.msra.mxu0 %v657
    %v659 = vand.u32 %v107, 4294901760
    %v660 = vsub.f32 %v107, %v659
    %661 = vmatpush.msra.mxu0 %v660
    %v662 = vand.u32 %v106, 4294901760
    %v663 = vsub.f32 %v106, %v662
    %664 = vmatpush.msra.mxu0 %v663
    %v665 = vand.u32 %v105, 4294901760
    %v666 = vsub.f32 %v105, %v665
    %667 = vmatpush.msra.mxu0 %v666
    %v668 = vand.u32 %v104, 4294901760
    %v669 = vsub.f32 %v104, %v668
    %670 = vmatpush.msra.mxu0 %v669
    %v671 = vand.u32 %v103, 4294901760
    %v672 = vsub.f32 %v103, %v671
    %673 = vmatpush.msra.mxu0 %v672
    %v674 = vand.u32 %v102, 4294901760
    %v675 = vsub.f32 %v102, %v674
    %676 = vmatpush.msra.mxu0 %v675
    %v677 = vand.u32 %v101, 4294901760
    %v678 = vsub.f32 %v101, %v677
    %679 = vmatpush.msra.mxu0 %v678
    %v680 = vand.u32 %v82, 4294901760
    %v681 = vsub.f32 %v82, %v680
    %682 = vmatmul.f32.gmra.mxu0 %v681
    %v683 = vpop.f32.mrf.mxu0
    %v684 = vadd.f32 %v630, %v683
    %685 = vdwg.mxu0
    %v686 = vand.u32 %v116, 4294901760
    %687 = vmatpush.msra.mxu0 %v686
    %v688 = vand.u32 %v115, 4294901760
    %689 = vmatpush.msra.mxu0 %v688
    %v690 = vand.u32 %v114, 4294901760
    %691 = vmatpush.msra.mxu0 %v690
    %v692 = vand.u32 %v113, 4294901760
    %693 = vmatpush.msra.mxu0 %v692
    %v694 = vand.u32 %v112, 4294901760
    %695 = vmatpush.msra.mxu0 %v694
    %v696 = vand.u32 %v111, 4294901760
    %697 = vmatpush.msra.mxu0 %v696
    %v698 = vand.u32 %v110, 4294901760
    %699 = vmatpush.msra.mxu0 %v698
    %v700 = vand.u32 %v109, 4294901760
    %701 = vmatpush.msra.mxu0 %v700
    %v702 = vand.u32 %v108, 4294901760
    %703 = vmatpush.msra.mxu0 %v702
    %v704 = vand.u32 %v107, 4294901760
    %705 = vmatpush.msra.mxu0 %v704
    %v706 = vand.u32 %v106, 4294901760
    %707 = vmatpush.msra.mxu0 %v706
    %v708 = vand.u32 %v105, 4294901760
    %709 = vmatpush.msra.mxu0 %v708
    %v710 = vand.u32 %v104, 4294901760
    %711 = vmatpush.msra.mxu0 %v710
    %v712 = vand.u32 %v103, 4294901760
    %713 = vmatpush.msra.mxu0 %v712
    %v714 = vand.u32 %v102, 4294901760
    %715 = vmatpush.msra.mxu0 %v714
    %v716 = vand.u32 %v101, 4294901760
    %717 = vmatpush.msra.mxu0 %v716
    %v718 = vand.u32 %v82, 4294901760
    %v719 = vsub.f32 %v82, %v718
    %v720 = vand.u32 %v719, 4294901760
    %721 = vmatmul.f32.gmra.mxu0 %v720
    %v722 = vpop.f32.mrf.mxu0
    %v723 = vadd.f32 %v684, %v722
    %724 = vdwg.mxu0
    %v725 = vand.u32 %v116, 4294901760
    %v726 = vsub.f32 %v116, %v725
    %v727 = vand.u32 %v726, 4294901760
    %728 = vmatpush.msra.mxu0 %v727
    %v729 = vand.u32 %v115, 4294901760
    %v730 = vsub.f32 %v115, %v729
    %v731 = vand.u32 %v730, 4294901760
    %732 = vmatpush.msra.mxu0 %v731
    %v733 = vand.u32 %v114, 4294901760
    %v734 = vsub.f32 %v114, %v733
    %v735 = vand.u32 %v734, 4294901760
    %736 = vmatpush.msra.mxu0 %v735
    %v737 = vand.u32 %v113, 4294901760
    %v738 = vsub.f32 %v113, %v737
    %v739 = vand.u32 %v738, 4294901760
    %740 = vmatpush.msra.mxu0 %v739
    %v741 = vand.u32 %v112, 4294901760
    %v742 = vsub.f32 %v112, %v741
    %v743 = vand.u32 %v742, 4294901760
    %744 = vmatpush.msra.mxu0 %v743
    %v745 = vand.u32 %v111, 4294901760
    %v746 = vsub.f32 %v111, %v745
    %v747 = vand.u32 %v746, 4294901760
    %748 = vmatpush.msra.mxu0 %v747
    %v749 = vand.u32 %v110, 4294901760
    %v750 = vsub.f32 %v110, %v749
    %v751 = vand.u32 %v750, 4294901760
    %752 = vmatpush.msra.mxu0 %v751
    %v753 = vand.u32 %v109, 4294901760
    %v754 = vsub.f32 %v109, %v753
    %v755 = vand.u32 %v754, 4294901760
    %756 = vmatpush.msra.mxu0 %v755
    %v757 = vand.u32 %v108, 4294901760
    %v758 = vsub.f32 %v108, %v757
    %v759 = vand.u32 %v758, 4294901760
    %760 = vmatpush.msra.mxu0 %v759
    %v761 = vand.u32 %v107, 4294901760
    %v762 = vsub.f32 %v107, %v761
    %v763 = vand.u32 %v762, 4294901760
    %764 = vmatpush.msra.mxu0 %v763
    %v765 = vand.u32 %v106, 4294901760
    %v766 = vsub.f32 %v106, %v765
    %v767 = vand.u32 %v766, 4294901760
    %768 = vmatpush.msra.mxu0 %v767
    %v769 = vand.u32 %v105, 4294901760
    %v770 = vsub.f32 %v105, %v769
    %v771 = vand.u32 %v770, 4294901760
    %772 = vmatpush.msra.mxu0 %v771
    %v773 = vand.u32 %v104, 4294901760
    %v774 = vsub.f32 %v104, %v773
    %v775 = vand.u32 %v774, 4294901760
    %776 = vmatpush.msra.mxu0 %v775
    %v777 = vand.u32 %v103, 4294901760
    %v778 = vsub.f32 %v103, %v777
    %v779 = vand.u32 %v778, 4294901760
    %780 = vmatpush.msra.mxu0 %v779
    %v781 = vand.u32 %v102, 4294901760
    %v782 = vsub.f32 %v102, %v781
    %v783 = vand.u32 %v782, 4294901760
    %784 = vmatpush.msra.mxu0 %v783
    %v785 = vand.u32 %v101, 4294901760
    %v786 = vsub.f32 %v101, %v785
    %v787 = vand.u32 %v786, 4294901760
    %788 = vmatpush.msra.mxu0 %v787
    %v789 = vand.u32 %v82, 4294901760
    %790 = vmatmul.f32.gmra.mxu0 %v789
    %v791 = vpop.f32.mrf.mxu0
    %v792 = vadd.f32 %v723, %v791
    %793 = vdwg.mxu0
    %v794 = vand.u32 %v116, 4294901760
    %795 = vmatpush.msra.mxu0 %v794
    %v796 = vand.u32 %v115, 4294901760
    %797 = vmatpush.msra.mxu0 %v796
    %v798 = vand.u32 %v114, 4294901760
    %799 = vmatpush.msra.mxu0 %v798
    %v800 = vand.u32 %v113, 4294901760
    %801 = vmatpush.msra.mxu0 %v800
    %v802 = vand.u32 %v112, 4294901760
    %803 = vmatpush.msra.mxu0 %v802
    %v804 = vand.u32 %v111, 4294901760
    %805 = vmatpush.msra.mxu0 %v804
    %v806 = vand.u32 %v110, 4294901760
    %807 = vmatpush.msra.mxu0 %v806
    %v808 = vand.u32 %v109, 4294901760
    %809 = vmatpush.msra.mxu0 %v808
    %v810 = vand.u32 %v108, 4294901760
    %811 = vmatpush.msra.mxu0 %v810
    %v812 = vand.u32 %v107, 4294901760
    %813 = vmatpush.msra.mxu0 %v812
    %v814 = vand.u32 %v106, 4294901760
    %815 = vmatpush.msra.mxu0 %v814
    %v816 = vand.u32 %v105, 4294901760
    %817 = vmatpush.msra.mxu0 %v816
    %v818 = vand.u32 %v104, 4294901760
    %819 = vmatpush.msra.mxu0 %v818
    %v820 = vand.u32 %v103, 4294901760
    %821 = vmatpush.msra.mxu0 %v820
    %v822 = vand.u32 %v102, 4294901760
    %823 = vmatpush.msra.mxu0 %v822
    %v824 = vand.u32 %v101, 4294901760
    %825 = vmatpush.msra.mxu0 %v824
    %v826 = vand.u32 %v82, 4294901760
    %827 = vmatmul.f32.gmra.mxu0 %v826
    %v828 = vpop.f32.mrf.mxu0
    %v829 = vadd.f32 %v792, %v828
    %830 = vdwg.mxu0
    %v831 = vand.u32 %v132, 4294901760
    %832 = vmatpush.msra.mxu0 %v831
    %v833 = vand.u32 %v131, 4294901760
    %834 = vmatpush.msra.mxu0 %v833
    %v835 = vand.u32 %v130, 4294901760
    %836 = vmatpush.msra.mxu0 %v835
    %v837 = vand.u32 %v129, 4294901760
    %838 = vmatpush.msra.mxu0 %v837
    %v839 = vand.u32 %v128, 4294901760
    %840 = vmatpush.msra.mxu0 %v839
    %v841 = vand.u32 %v127, 4294901760
    %842 = vmatpush.msra.mxu0 %v841
    %v843 = vand.u32 %v126, 4294901760
    %844 = vmatpush.msra.mxu0 %v843
    %v845 = vand.u32 %v125, 4294901760
    %846 = vmatpush.msra.mxu0 %v845
    %v847 = vand.u32 %v124, 4294901760
    %848 = vmatpush.msra.mxu0 %v847
    %v849 = vand.u32 %v123, 4294901760
    %850 = vmatpush.msra.mxu0 %v849
    %v851 = vand.u32 %v122, 4294901760
    %852 = vmatpush.msra.mxu0 %v851
    %v853 = vand.u32 %v121, 4294901760
    %854 = vmatpush.msra.mxu0 %v853
    %v855 = vand.u32 %v120, 4294901760
    %856 = vmatpush.msra.mxu0 %v855
    %v857 = vand.u32 %v119, 4294901760
    %858 = vmatpush.msra.mxu0 %v857
    %v859 = vand.u32 %v118, 4294901760
    %860 = vmatpush.msra.mxu0 %v859
    %v861 = vand.u32 %v117, 4294901760
    %862 = vmatpush.msra.mxu0 %v861
    %v863 = vand.u32 %v83, 4294901760
    %v864 = vsub.f32 %v83, %v863
    %v865 = vand.u32 %v864, 4294901760
    %v866 = vsub.f32 %v864, %v865
    %v867 = vand.u32 %v866, 4294901760
    %868 = vmatmul.f32.gmra.mxu0 %v867
    %v869 = vpop.f32.mrf.mxu0
    %v870 = vadd.f32 %v829, %v869
    %871 = vdwg.mxu0
    %v872 = vand.u32 %v132, 4294901760
    %v873 = vsub.f32 %v132, %v872
    %v874 = vand.u32 %v873, 4294901760
    %v875 = vsub.f32 %v873, %v874
    %v876 = vand.u32 %v875, 4294901760
    %877 = vmatpush.msra.mxu0 %v876
    %v878 = vand.u32 %v131, 4294901760
    %v879 = vsub.f32 %v131, %v878
    %v880 = vand.u32 %v879, 4294901760
    %v881 = vsub.f32 %v879, %v880
    %v882 = vand.u32 %v881, 4294901760
    %883 = vmatpush.msra.mxu0 %v882
    %v884 = vand.u32 %v130, 4294901760
    %v885 = vsub.f32 %v130, %v884
    %v886 = vand.u32 %v885, 4294901760
    %v887 = vsub.f32 %v885, %v886
    %v888 = vand.u32 %v887, 4294901760
    %889 = vmatpush.msra.mxu0 %v888
    %v890 = vand.u32 %v129, 4294901760
    %v891 = vsub.f32 %v129, %v890
    %v892 = vand.u32 %v891, 4294901760
    %v893 = vsub.f32 %v891, %v892
    %v894 = vand.u32 %v893, 4294901760
    %895 = vmatpush.msra.mxu0 %v894
    %v896 = vand.u32 %v128, 4294901760
    %v897 = vsub.f32 %v128, %v896
    %v898 = vand.u32 %v897, 4294901760
    %v899 = vsub.f32 %v897, %v898
    %v900 = vand.u32 %v899, 4294901760
    %901 = vmatpush.msra.mxu0 %v900
    %v902 = vand.u32 %v127, 4294901760
    %v903 = vsub.f32 %v127, %v902
    %v904 = vand.u32 %v903, 4294901760
    %v905 = vsub.f32 %v903, %v904
    %v906 = vand.u32 %v905, 4294901760
    %907 = vmatpush.msra.mxu0 %v906
    %v908 = vand.u32 %v126, 4294901760
    %v909 = vsub.f32 %v126, %v908
    %v910 = vand.u32 %v909, 4294901760
    %v911 = vsub.f32 %v909, %v910
    %v912 = vand.u32 %v911, 4294901760
    %913 = vmatpush.msra.mxu0 %v912
    %v914 = vand.u32 %v125, 4294901760
    %v915 = vsub.f32 %v125, %v914
    %v916 = vand.u32 %v915, 4294901760
    %v917 = vsub.f32 %v915, %v916
    %v918 = vand.u32 %v917, 4294901760
    %919 = vmatpush.msra.mxu0 %v918
    %v920 = vand.u32 %v124, 4294901760
    %v921 = vsub.f32 %v124, %v920
    %v922 = vand.u32 %v921, 4294901760
    %v923 = vsub.f32 %v921, %v922
    %v924 = vand.u32 %v923, 4294901760
    %925 = vmatpush.msra.mxu0 %v924
    %v926 = vand.u32 %v123, 4294901760
    %v927 = vsub.f32 %v123, %v926
    %v928 = vand.u32 %v927, 4294901760
    %v929 = vsub.f32 %v927, %v928
    %v930 = vand.u32 %v929, 4294901760
    %931 = vmatpush.msra.mxu0 %v930
    %v932 = vand.u32 %v122, 4294901760
    %v933 = vsub.f32 %v122, %v932
    %v934 = vand.u32 %v933, 4294901760
    %v935 = vsub.f32 %v933, %v934
    %v936 = vand.u32 %v935, 4294901760
    %937 = vmatpush.msra.mxu0 %v936
    %v938 = vand.u32 %v121, 4294901760
    %v939 = vsub.f32 %v121, %v938
    %v940 = vand.u32 %v939, 4294901760
    %v941 = vsub.f32 %v939, %v940
    %v942 = vand.u32 %v941, 4294901760
    %943 = vmatpush.msra.mxu0 %v942
    %v944 = vand.u32 %v120, 4294901760
    %v945 = vsub.f32 %v120, %v944
    %v946 = vand.u32 %v945, 4294901760
    %v947 = vsub.f32 %v945, %v946
    %v948 = vand.u32 %v947, 4294901760
    %949 = vmatpush.msra.mxu0 %v948
    %v950 = vand.u32 %v119, 4294901760
    %v951 = vsub.f32 %v119, %v950
    %v952 = vand.u32 %v951, 4294901760
    %v953 = vsub.f32 %v951, %v952
    %v954 = vand.u32 %v953, 4294901760
    %955 = vmatpush.msra.mxu0 %v954
    %v956 = vand.u32 %v118, 4294901760
    %v957 = vsub.f32 %v118, %v956
    %v958 = vand.u32 %v957, 4294901760
    %v959 = vsub.f32 %v957, %v958
    %v960 = vand.u32 %v959, 4294901760
    %961 = vmatpush.msra.mxu0 %v960
    %v962 = vand.u32 %v117, 4294901760
    %v963 = vsub.f32 %v117, %v962
    %v964 = vand.u32 %v963, 4294901760
    %v965 = vsub.f32 %v963, %v964
    %v966 = vand.u32 %v965, 4294901760
    %967 = vmatpush.msra.mxu0 %v966
    %v968 = vand.u32 %v83, 4294901760
    %969 = vmatmul.f32.gmra.mxu0 %v968
    %v970 = vpop.f32.mrf.mxu0
    %v971 = vadd.f32 %v870, %v970
    %972 = vdwg.mxu0
    %v973 = vand.u32 %v132, 4294901760
    %v974 = vsub.f32 %v132, %v973
    %975 = vmatpush.msra.mxu0 %v974
    %v976 = vand.u32 %v131, 4294901760
    %v977 = vsub.f32 %v131, %v976
    %978 = vmatpush.msra.mxu0 %v977
    %v979 = vand.u32 %v130, 4294901760
    %v980 = vsub.f32 %v130, %v979
    %981 = vmatpush.msra.mxu0 %v980
    %v982 = vand.u32 %v129, 4294901760
    %v983 = vsub.f32 %v129, %v982
    %984 = vmatpush.msra.mxu0 %v983
    %v985 = vand.u32 %v128, 4294901760
    %v986 = vsub.f32 %v128, %v985
    %987 = vmatpush.msra.mxu0 %v986
    %v988 = vand.u32 %v127, 4294901760
    %v989 = vsub.f32 %v127, %v988
    %990 = vmatpush.msra.mxu0 %v989
    %v991 = vand.u32 %v126, 4294901760
    %v992 = vsub.f32 %v126, %v991
    %993 = vmatpush.msra.mxu0 %v992
    %v994 = vand.u32 %v125, 4294901760
    %v995 = vsub.f32 %v125, %v994
    %996 = vmatpush.msra.mxu0 %v995
    %v997 = vand.u32 %v124, 4294901760
    %v998 = vsub.f32 %v124, %v997
    %999 = vmatpush.msra.mxu0 %v998
    %v1000 = vand.u32 %v123, 4294901760
    %v1001 = vsub.f32 %v123, %v1000
    %1002 = vmatpush.msra.mxu0 %v1001
    %v1003 = vand.u32 %v122, 4294901760
    %v1004 = vsub.f32 %v122, %v1003
    %1005 = vmatpush.msra.mxu0 %v1004
    %v1006 = vand.u32 %v121, 4294901760
    %v1007 = vsub.f32 %v121, %v1006
    %1008 = vmatpush.msra.mxu0 %v1007
    %v1009 = vand.u32 %v120, 4294901760
    %v1010 = vsub.f32 %v120, %v1009
    %1011 = vmatpush.msra.mxu0 %v1010
    %v1012 = vand.u32 %v119, 4294901760
    %v1013 = vsub.f32 %v119, %v1012
    %1014 = vmatpush.msra.mxu0 %v1013
    %v1015 = vand.u32 %v118, 4294901760
    %v1016 = vsub.f32 %v118, %v1015
    %1017 = vmatpush.msra.mxu0 %v1016
    %v1018 = vand.u32 %v117, 4294901760
    %v1019 = vsub.f32 %v117, %v1018
    %1020 = vmatpush.msra.mxu0 %v1019
    %v1021 = vand.u32 %v83, 4294901760
    %v1022 = vsub.f32 %v83, %v1021
    %1023 = vmatmul.f32.gmra.mxu0 %v1022
    %v1024 = vpop.f32.mrf.mxu0
    %v1025 = vadd.f32 %v971, %v1024
    %1026 = vdwg.mxu0
    %v1027 = vand.u32 %v132, 4294901760
    %1028 = vmatpush.msra.mxu0 %v1027
    %v1029 = vand.u32 %v131, 4294901760
    %1030 = vmatpush.msra.mxu0 %v1029
    %v1031 = vand.u32 %v130, 4294901760
    %1032 = vmatpush.msra.mxu0 %v1031
    %v1033 = vand.u32 %v129, 4294901760
    %1034 = vmatpush.msra.mxu0 %v1033
    %v1035 = vand.u32 %v128, 4294901760
    %1036 = vmatpush.msra.mxu0 %v1035
    %v1037 = vand.u32 %v127, 4294901760
    %1038 = vmatpush.msra.mxu0 %v1037
    %v1039 = vand.u32 %v126, 4294901760
    %1040 = vmatpush.msra.mxu0 %v1039
    %v1041 = vand.u32 %v125, 4294901760
    %1042 = vmatpush.msra.mxu0 %v1041
    %v1043 = vand.u32 %v124, 4294901760
    %1044 = vmatpush.msra.mxu0 %v1043
    %v1045 = vand.u32 %v123, 4294901760
    %1046 = vmatpush.msra.mxu0 %v1045
    %v1047 = vand.u32 %v122, 4294901760
    %1048 = vmatpush.msra.mxu0 %v1047
    %v1049 = vand.u32 %v121, 4294901760
    %1050 = vmatpush.msra.mxu0 %v1049
    %v1051 = vand.u32 %v120, 4294901760
    %1052 = vmatpush.msra.mxu0 %v1051
    %v1053 = vand.u32 %v119, 4294901760
    %1054 = vmatpush.msra.mxu0 %v1053
    %v1055 = vand.u32 %v118, 4294901760
    %1056 = vmatpush.msra.mxu0 %v1055
    %v1057 = vand.u32 %v117, 4294901760
    %1058 = vmatpush.msra.mxu0 %v1057
    %v1059 = vand.u32 %v83, 4294901760
    %v1060 = vsub.f32 %v83, %v1059
    %v1061 = vand.u32 %v1060, 4294901760
    %1062 = vmatmul.f32.gmra.mxu0 %v1061
    %v1063 = vpop.f32.mrf.mxu0
    %v1064 = vadd.f32 %v1025, %v1063
    %1065 = vdwg.mxu0
    %v1066 = vand.u32 %v132, 4294901760
    %v1067 = vsub.f32 %v132, %v1066
    %v1068 = vand.u32 %v1067, 4294901760
    %1069 = vmatpush.msra.mxu0 %v1068
    %v1070 = vand.u32 %v131, 4294901760
    %v1071 = vsub.f32 %v131, %v1070
    %v1072 = vand.u32 %v1071, 4294901760
    %1073 = vmatpush.msra.mxu0 %v1072
    %v1074 = vand.u32 %v130, 4294901760
    %v1075 = vsub.f32 %v130, %v1074
    %v1076 = vand.u32 %v1075, 4294901760
    %1077 = vmatpush.msra.mxu0 %v1076
    %v1078 = vand.u32 %v129, 4294901760
    %v1079 = vsub.f32 %v129, %v1078
    %v1080 = vand.u32 %v1079, 4294901760
    %1081 = vmatpush.msra.mxu0 %v1080
    %v1082 = vand.u32 %v128, 4294901760
    %v1083 = vsub.f32 %v128, %v1082
    %v1084 = vand.u32 %v1083, 4294901760
    %1085 = vmatpush.msra.mxu0 %v1084
    %v1086 = vand.u32 %v127, 4294901760
    %v1087 = vsub.f32 %v127, %v1086
    %v1088 = vand.u32 %v1087, 4294901760
    %1089 = vmatpush.msra.mxu0 %v1088
    %v1090 = vand.u32 %v126, 4294901760
    %v1091 = vsub.f32 %v126, %v1090
    %v1092 = vand.u32 %v1091, 4294901760
    %1093 = vmatpush.msra.mxu0 %v1092
    %v1094 = vand.u32 %v125, 4294901760
    %v1095 = vsub.f32 %v125, %v1094
    %v1096 = vand.u32 %v1095, 4294901760
    %1097 = vmatpush.msra.mxu0 %v1096
    %v1098 = vand.u32 %v124, 4294901760
    %v1099 = vsub.f32 %v124, %v1098
    %v1100 = vand.u32 %v1099, 4294901760
    %1101 = vmatpush.msra.mxu0 %v1100
    %v1102 = vand.u32 %v123, 4294901760
    %v1103 = vsub.f32 %v123, %v1102
    %v1104 = vand.u32 %v1103, 4294901760
    %1105 = vmatpush.msra.mxu0 %v1104
    %v1106 = vand.u32 %v122, 4294901760
    %v1107 = vsub.f32 %v122, %v1106
    %v1108 = vand.u32 %v1107, 4294901760
    %1109 = vmatpush.msra.mxu0 %v1108
    %v1110 = vand.u32 %v121, 4294901760
    %v1111 = vsub.f32 %v121, %v1110
    %v1112 = vand.u32 %v1111, 4294901760
    %1113 = vmatpush.msra.mxu0 %v1112
    %v1114 = vand.u32 %v120, 4294901760
    %v1115 = vsub.f32 %v120, %v1114
    %v1116 = vand.u32 %v1115, 4294901760
    %1117 = vmatpush.msra.mxu0 %v1116
    %v1118 = vand.u32 %v119, 4294901760
    %v1119 = vsub.f32 %v119, %v1118
    %v1120 = vand.u32 %v1119, 4294901760
    %1121 = vmatpush.msra.mxu0 %v1120
    %v1122 = vand.u32 %v118, 4294901760
    %v1123 = vsub.f32 %v118, %v1122
    %v1124 = vand.u32 %v1123, 4294901760
    %1125 = vmatpush.msra.mxu0 %v1124
    %v1126 = vand.u32 %v117, 4294901760
    %v1127 = vsub.f32 %v117, %v1126
    %v1128 = vand.u32 %v1127, 4294901760
    %1129 = vmatpush.msra.mxu0 %v1128
    %v1130 = vand.u32 %v83, 4294901760
    %1131 = vmatmul.f32.gmra.mxu0 %v1130
    %v1132 = vpop.f32.mrf.mxu0
    %v1133 = vadd.f32 %v1064, %v1132
    %1134 = vdwg.mxu0
    %v1135 = vand.u32 %v132, 4294901760
    %1136 = vmatpush.msra.mxu0 %v1135
    %v1137 = vand.u32 %v131, 4294901760
    %1138 = vmatpush.msra.mxu0 %v1137
    %v1139 = vand.u32 %v130, 4294901760
    %1140 = vmatpush.msra.mxu0 %v1139
    %v1141 = vand.u32 %v129, 4294901760
    %1142 = vmatpush.msra.mxu0 %v1141
    %v1143 = vand.u32 %v128, 4294901760
    %1144 = vmatpush.msra.mxu0 %v1143
    %v1145 = vand.u32 %v127, 4294901760
    %1146 = vmatpush.msra.mxu0 %v1145
    %v1147 = vand.u32 %v126, 4294901760
    %1148 = vmatpush.msra.mxu0 %v1147
    %v1149 = vand.u32 %v125, 4294901760
    %1150 = vmatpush.msra.mxu0 %v1149
    %v1151 = vand.u32 %v124, 4294901760
    %1152 = vmatpush.msra.mxu0 %v1151
    %v1153 = vand.u32 %v123, 4294901760
    %1154 = vmatpush.msra.mxu0 %v1153
    %v1155 = vand.u32 %v122, 4294901760
    %1156 = vmatpush.msra.mxu0 %v1155
    %v1157 = vand.u32 %v121, 4294901760
    %1158 = vmatpush.msra.mxu0 %v1157
    %v1159 = vand.u32 %v120, 4294901760
    %1160 = vmatpush.msra.mxu0 %v1159
    %v1161 = vand.u32 %v119, 4294901760
    %1162 = vmatpush.msra.mxu0 %v1161
    %v1163 = vand.u32 %v118, 4294901760
    %1164 = vmatpush.msra.mxu0 %v1163
    %v1165 = vand.u32 %v117, 4294901760
    %1166 = vmatpush.msra.mxu0 %v1165
    %v1167 = vand.u32 %v83, 4294901760
    %1168 = vmatmul.f32.gmra.mxu0 %v1167
    %v1169 = vpop.f32.mrf.mxu0
    %v1170 = vadd.f32 %v1133, %v1169
    %1171 = vdwg.mxu0
    %v1172 = vand.u32 %v148, 4294901760
    %1173 = vmatpush.msra.mxu0 %v1172
    %v1174 = vand.u32 %v147, 4294901760
    %1175 = vmatpush.msra.mxu0 %v1174
    %v1176 = vand.u32 %v146, 4294901760
    %1177 = vmatpush.msra.mxu0 %v1176
    %v1178 = vand.u32 %v145, 4294901760
    %1179 = vmatpush.msra.mxu0 %v1178
    %v1180 = vand.u32 %v144, 4294901760
    %1181 = vmatpush.msra.mxu0 %v1180
    %v1182 = vand.u32 %v143, 4294901760
    %1183 = vmatpush.msra.mxu0 %v1182
    %v1184 = vand.u32 %v142, 4294901760
    %1185 = vmatpush.msra.mxu0 %v1184
    %v1186 = vand.u32 %v141, 4294901760
    %1187 = vmatpush.msra.mxu0 %v1186
    %v1188 = vand.u32 %v140, 4294901760
    %1189 = vmatpush.msra.mxu0 %v1188
    %v1190 = vand.u32 %v139, 4294901760
    %1191 = vmatpush.msra.mxu0 %v1190
    %v1192 = vand.u32 %v138, 4294901760
    %1193 = vmatpush.msra.mxu0 %v1192
    %v1194 = vand.u32 %v137, 4294901760
    %1195 = vmatpush.msra.mxu0 %v1194
    %v1196 = vand.u32 %v136, 4294901760
    %1197 = vmatpush.msra.mxu0 %v1196
    %v1198 = vand.u32 %v135, 4294901760
    %1199 = vmatpush.msra.mxu0 %v1198
    %v1200 = vand.u32 %v134, 4294901760
    %1201 = vmatpush.msra.mxu0 %v1200
    %v1202 = vand.u32 %v133, 4294901760
    %1203 = vmatpush.msra.mxu0 %v1202
    %v1204 = vand.u32 %v84, 4294901760
    %v1205 = vsub.f32 %v84, %v1204
    %v1206 = vand.u32 %v1205, 4294901760
    %v1207 = vsub.f32 %v1205, %v1206
    %v1208 = vand.u32 %v1207, 4294901760
    %1209 = vmatmul.f32.gmra.mxu0 %v1208
    %v1210 = vpop.f32.mrf.mxu0
    %v1211 = vadd.f32 %v1170, %v1210
    %1212 = vdwg.mxu0
    %v1213 = vand.u32 %v148, 4294901760
    %v1214 = vsub.f32 %v148, %v1213
    %v1215 = vand.u32 %v1214, 4294901760
    %v1216 = vsub.f32 %v1214, %v1215
    %v1217 = vand.u32 %v1216, 4294901760
    %1218 = vmatpush.msra.mxu0 %v1217
    %v1219 = vand.u32 %v147, 4294901760
    %v1220 = vsub.f32 %v147, %v1219
    %v1221 = vand.u32 %v1220, 4294901760
    %v1222 = vsub.f32 %v1220, %v1221
    %v1223 = vand.u32 %v1222, 4294901760
    %1224 = vmatpush.msra.mxu0 %v1223
    %v1225 = vand.u32 %v146, 4294901760
    %v1226 = vsub.f32 %v146, %v1225
    %v1227 = vand.u32 %v1226, 4294901760
    %v1228 = vsub.f32 %v1226, %v1227
    %v1229 = vand.u32 %v1228, 4294901760
    %1230 = vmatpush.msra.mxu0 %v1229
    %v1231 = vand.u32 %v145, 4294901760
    %v1232 = vsub.f32 %v145, %v1231
    %v1233 = vand.u32 %v1232, 4294901760
    %v1234 = vsub.f32 %v1232, %v1233
    %v1235 = vand.u32 %v1234, 4294901760
    %1236 = vmatpush.msra.mxu0 %v1235
    %v1237 = vand.u32 %v144, 4294901760
    %v1238 = vsub.f32 %v144, %v1237
    %v1239 = vand.u32 %v1238, 4294901760
    %v1240 = vsub.f32 %v1238, %v1239
    %v1241 = vand.u32 %v1240, 4294901760
    %1242 = vmatpush.msra.mxu0 %v1241
    %v1243 = vand.u32 %v143, 4294901760
    %v1244 = vsub.f32 %v143, %v1243
    %v1245 = vand.u32 %v1244, 4294901760
    %v1246 = vsub.f32 %v1244, %v1245
    %v1247 = vand.u32 %v1246, 4294901760
    %1248 = vmatpush.msra.mxu0 %v1247
    %v1249 = vand.u32 %v142, 4294901760
    %v1250 = vsub.f32 %v142, %v1249
    %v1251 = vand.u32 %v1250, 4294901760
    %v1252 = vsub.f32 %v1250, %v1251
    %v1253 = vand.u32 %v1252, 4294901760
    %1254 = vmatpush.msra.mxu0 %v1253
    %v1255 = vand.u32 %v141, 4294901760
    %v1256 = vsub.f32 %v141, %v1255
    %v1257 = vand.u32 %v1256, 4294901760
    %v1258 = vsub.f32 %v1256, %v1257
    %v1259 = vand.u32 %v1258, 4294901760
    %1260 = vmatpush.msra.mxu0 %v1259
    %v1261 = vand.u32 %v140, 4294901760
    %v1262 = vsub.f32 %v140, %v1261
    %v1263 = vand.u32 %v1262, 4294901760
    %v1264 = vsub.f32 %v1262, %v1263
    %v1265 = vand.u32 %v1264, 4294901760
    %1266 = vmatpush.msra.mxu0 %v1265
    %v1267 = vand.u32 %v139, 4294901760
    %v1268 = vsub.f32 %v139, %v1267
    %v1269 = vand.u32 %v1268, 4294901760
    %v1270 = vsub.f32 %v1268, %v1269
    %v1271 = vand.u32 %v1270, 4294901760
    %1272 = vmatpush.msra.mxu0 %v1271
    %v1273 = vand.u32 %v138, 4294901760
    %v1274 = vsub.f32 %v138, %v1273
    %v1275 = vand.u32 %v1274, 4294901760
    %v1276 = vsub.f32 %v1274, %v1275
    %v1277 = vand.u32 %v1276, 4294901760
    %1278 = vmatpush.msra.mxu0 %v1277
    %v1279 = vand.u32 %v137, 4294901760
    %v1280 = vsub.f32 %v137, %v1279
    %v1281 = vand.u32 %v1280, 4294901760
    %v1282 = vsub.f32 %v1280, %v1281
    %v1283 = vand.u32 %v1282, 4294901760
    %1284 = vmatpush.msra.mxu0 %v1283
    %v1285 = vand.u32 %v136, 4294901760
    %v1286 = vsub.f32 %v136, %v1285
    %v1287 = vand.u32 %v1286, 4294901760
    %v1288 = vsub.f32 %v1286, %v1287
    %v1289 = vand.u32 %v1288, 4294901760
    %1290 = vmatpush.msra.mxu0 %v1289
    %v1291 = vand.u32 %v135, 4294901760
    %v1292 = vsub.f32 %v135, %v1291
    %v1293 = vand.u32 %v1292, 4294901760
    %v1294 = vsub.f32 %v1292, %v1293
    %v1295 = vand.u32 %v1294, 4294901760
    %1296 = vmatpush.msra.mxu0 %v1295
    %v1297 = vand.u32 %v134, 4294901760
    %v1298 = vsub.f32 %v134, %v1297
    %v1299 = vand.u32 %v1298, 4294901760
    %v1300 = vsub.f32 %v1298, %v1299
    %v1301 = vand.u32 %v1300, 4294901760
    %1302 = vmatpush.msra.mxu0 %v1301
    %v1303 = vand.u32 %v133, 4294901760
    %v1304 = vsub.f32 %v133, %v1303
    %v1305 = vand.u32 %v1304, 4294901760
    %v1306 = vsub.f32 %v1304, %v1305
    %v1307 = vand.u32 %v1306, 4294901760
    %1308 = vmatpush.msra.mxu0 %v1307
    %v1309 = vand.u32 %v84, 4294901760
    %1310 = vmatmul.f32.gmra.mxu0 %v1309
    %v1311 = vpop.f32.mrf.mxu0
    %v1312 = vadd.f32 %v1211, %v1311
    %1313 = vdwg.mxu0
    %v1314 = vand.u32 %v148, 4294901760
    %v1315 = vsub.f32 %v148, %v1314
    %1316 = vmatpush.msra.mxu0 %v1315
    %v1317 = vand.u32 %v147, 4294901760
    %v1318 = vsub.f32 %v147, %v1317
    %1319 = vmatpush.msra.mxu0 %v1318
    %v1320 = vand.u32 %v146, 4294901760
    %v1321 = vsub.f32 %v146, %v1320
    %1322 = vmatpush.msra.mxu0 %v1321
    %v1323 = vand.u32 %v145, 4294901760
    %v1324 = vsub.f32 %v145, %v1323
    %1325 = vmatpush.msra.mxu0 %v1324
    %v1326 = vand.u32 %v144, 4294901760
    %v1327 = vsub.f32 %v144, %v1326
    %1328 = vmatpush.msra.mxu0 %v1327
    %v1329 = vand.u32 %v143, 4294901760
    %v1330 = vsub.f32 %v143, %v1329
    %1331 = vmatpush.msra.mxu0 %v1330
    %v1332 = vand.u32 %v142, 4294901760
    %v1333 = vsub.f32 %v142, %v1332
    %1334 = vmatpush.msra.mxu0 %v1333
    %v1335 = vand.u32 %v141, 4294901760
    %v1336 = vsub.f32 %v141, %v1335
    %1337 = vmatpush.msra.mxu0 %v1336
    %v1338 = vand.u32 %v140, 4294901760
    %v1339 = vsub.f32 %v140, %v1338
    %1340 = vmatpush.msra.mxu0 %v1339
    %v1341 = vand.u32 %v139, 4294901760
    %v1342 = vsub.f32 %v139, %v1341
    %1343 = vmatpush.msra.mxu0 %v1342
    %v1344 = vand.u32 %v138, 4294901760
    %v1345 = vsub.f32 %v138, %v1344
    %1346 = vmatpush.msra.mxu0 %v1345
    %v1347 = vand.u32 %v137, 4294901760
    %v1348 = vsub.f32 %v137, %v1347
    %1349 = vmatpush.msra.mxu0 %v1348
    %v1350 = vand.u32 %v136, 4294901760
    %v1351 = vsub.f32 %v136, %v1350
    %1352 = vmatpush.msra.mxu0 %v1351
    %v1353 = vand.u32 %v135, 4294901760
    %v1354 = vsub.f32 %v135, %v1353
    %1355 = vmatpush.msra.mxu0 %v1354
    %v1356 = vand.u32 %v134, 4294901760
    %v1357 = vsub.f32 %v134, %v1356
    %1358 = vmatpush.msra.mxu0 %v1357
    %v1359 = vand.u32 %v133, 4294901760
    %v1360 = vsub.f32 %v133, %v1359
    %1361 = vmatpush.msra.mxu0 %v1360
    %v1362 = vand.u32 %v84, 4294901760
    %v1363 = vsub.f32 %v84, %v1362
    %1364 = vmatmul.f32.gmra.mxu0 %v1363
    %v1365 = vpop.f32.mrf.mxu0
    %v1366 = vadd.f32 %v1312, %v1365
    %1367 = vdwg.mxu0
    %v1368 = vand.u32 %v148, 4294901760
    %1369 = vmatpush.msra.mxu0 %v1368
    %v1370 = vand.u32 %v147, 4294901760
    %1371 = vmatpush.msra.mxu0 %v1370
    %v1372 = vand.u32 %v146, 4294901760
    %1373 = vmatpush.msra.mxu0 %v1372
    %v1374 = vand.u32 %v145, 4294901760
    %1375 = vmatpush.msra.mxu0 %v1374
    %v1376 = vand.u32 %v144, 4294901760
    %1377 = vmatpush.msra.mxu0 %v1376
    %v1378 = vand.u32 %v143, 4294901760
    %1379 = vmatpush.msra.mxu0 %v1378
    %v1380 = vand.u32 %v142, 4294901760
    %1381 = vmatpush.msra.mxu0 %v1380
    %v1382 = vand.u32 %v141, 4294901760
    %1383 = vmatpush.msra.mxu0 %v1382
    %v1384 = vand.u32 %v140, 4294901760
    %1385 = vmatpush.msra.mxu0 %v1384
    %v1386 = vand.u32 %v139, 4294901760
    %1387 = vmatpush.msra.mxu0 %v1386
    %v1388 = vand.u32 %v138, 4294901760
    %1389 = vmatpush.msra.mxu0 %v1388
    %v1390 = vand.u32 %v137, 4294901760
    %1391 = vmatpush.msra.mxu0 %v1390
    %v1392 = vand.u32 %v136, 4294901760
    %1393 = vmatpush.msra.mxu0 %v1392
    %v1394 = vand.u32 %v135, 4294901760
    %1395 = vmatpush.msra.mxu0 %v1394
    %v1396 = vand.u32 %v134, 4294901760
    %1397 = vmatpush.msra.mxu0 %v1396
    %v1398 = vand.u32 %v133, 4294901760
    %1399 = vmatpush.msra.mxu0 %v1398
    %v1400 = vand.u32 %v84, 4294901760
    %v1401 = vsub.f32 %v84, %v1400
    %v1402 = vand.u32 %v1401, 4294901760
    %1403 = vmatmul.f32.gmra.mxu0 %v1402
    %v1404 = vpop.f32.mrf.mxu0
    %v1405 = vadd.f32 %v1366, %v1404
    %1406 = vdwg.mxu0
    %v1407 = vand.u32 %v148, 4294901760
    %v1408 = vsub.f32 %v148, %v1407
    %v1409 = vand.u32 %v1408, 4294901760
    %1410 = vmatpush.msra.mxu0 %v1409
    %v1411 = vand.u32 %v147, 4294901760
    %v1412 = vsub.f32 %v147, %v1411
    %v1413 = vand.u32 %v1412, 4294901760
    %1414 = vmatpush.msra.mxu0 %v1413
    %v1415 = vand.u32 %v146, 4294901760
    %v1416 = vsub.f32 %v146, %v1415
    %v1417 = vand.u32 %v1416, 4294901760
    %1418 = vmatpush.msra.mxu0 %v1417
    %v1419 = vand.u32 %v145, 4294901760
    %v1420 = vsub.f32 %v145, %v1419
    %v1421 = vand.u32 %v1420, 4294901760
    %1422 = vmatpush.msra.mxu0 %v1421
    %v1423 = vand.u32 %v144, 4294901760
    %v1424 = vsub.f32 %v144, %v1423
    %v1425 = vand.u32 %v1424, 4294901760
    %1426 = vmatpush.msra.mxu0 %v1425
    %v1427 = vand.u32 %v143, 4294901760
    %v1428 = vsub.f32 %v143, %v1427
    %v1429 = vand.u32 %v1428, 4294901760
    %1430 = vmatpush.msra.mxu0 %v1429
    %v1431 = vand.u32 %v142, 4294901760
    %v1432 = vsub.f32 %v142, %v1431
    %v1433 = vand.u32 %v1432, 4294901760
    %1434 = vmatpush.msra.mxu0 %v1433
    %v1435 = vand.u32 %v141, 4294901760
    %v1436 = vsub.f32 %v141, %v1435
    %v1437 = vand.u32 %v1436, 4294901760
    %1438 = vmatpush.msra.mxu0 %v1437
    %v1439 = vand.u32 %v140, 4294901760
    %v1440 = vsub.f32 %v140, %v1439
    %v1441 = vand.u32 %v1440, 4294901760
    %1442 = vmatpush.msra.mxu0 %v1441
    %v1443 = vand.u32 %v139, 4294901760
    %v1444 = vsub.f32 %v139, %v1443
    %v1445 = vand.u32 %v1444, 4294901760
    %1446 = vmatpush.msra.mxu0 %v1445
    %v1447 = vand.u32 %v138, 4294901760
    %v1448 = vsub.f32 %v138, %v1447
    %v1449 = vand.u32 %v1448, 4294901760
    %1450 = vmatpush.msra.mxu0 %v1449
    %v1451 = vand.u32 %v137, 4294901760
    %v1452 = vsub.f32 %v137, %v1451
    %v1453 = vand.u32 %v1452, 4294901760
    %1454 = vmatpush.msra.mxu0 %v1453
    %v1455 = vand.u32 %v136, 4294901760
    %v1456 = vsub.f32 %v136, %v1455
    %v1457 = vand.u32 %v1456, 4294901760
    %1458 = vmatpush.msra.mxu0 %v1457
    %v1459 = vand.u32 %v135, 4294901760
    %v1460 = vsub.f32 %v135, %v1459
    %v1461 = vand.u32 %v1460, 4294901760
    %1462 = vmatpush.msra.mxu0 %v1461
    %v1463 = vand.u32 %v134, 4294901760
    %v1464 = vsub.f32 %v134, %v1463
    %v1465 = vand.u32 %v1464, 4294901760
    %1466 = vmatpush.msra.mxu0 %v1465
    %v1467 = vand.u32 %v133, 4294901760
    %v1468 = vsub.f32 %v133, %v1467
    %v1469 = vand.u32 %v1468, 4294901760
    %1470 = vmatpush.msra.mxu0 %v1469
    %v1471 = vand.u32 %v84, 4294901760
    %1472 = vmatmul.f32.gmra.mxu0 %v1471
    %v1473 = vpop.f32.mrf.mxu0
    %v1474 = vadd.f32 %v1405, %v1473
    %1475 = vdwg.mxu0
    %v1476 = vand.u32 %v148, 4294901760
    %1477 = vmatpush.msra.mxu0 %v1476
    %v1478 = vand.u32 %v147, 4294901760
    %1479 = vmatpush.msra.mxu0 %v1478
    %v1480 = vand.u32 %v146, 4294901760
    %1481 = vmatpush.msra.mxu0 %v1480
    %v1482 = vand.u32 %v145, 4294901760
    %1483 = vmatpush.msra.mxu0 %v1482
    %v1484 = vand.u32 %v144, 4294901760
    %1485 = vmatpush.msra.mxu0 %v1484
    %v1486 = vand.u32 %v143, 4294901760
    %1487 = vmatpush.msra.mxu0 %v1486
    %v1488 = vand.u32 %v142, 4294901760
    %1489 = vmatpush.msra.mxu0 %v1488
    %v1490 = vand.u32 %v141, 4294901760
    %1491 = vmatpush.msra.mxu0 %v1490
    %v1492 = vand.u32 %v140, 4294901760
    %1493 = vmatpush.msra.mxu0 %v1492
    %v1494 = vand.u32 %v139, 4294901760
    %1495 = vmatpush.msra.mxu0 %v1494
    %v1496 = vand.u32 %v138, 4294901760
    %1497 = vmatpush.msra.mxu0 %v1496
    %v1498 = vand.u32 %v137, 4294901760
    %1499 = vmatpush.msra.mxu0 %v1498
    %v1500 = vand.u32 %v136, 4294901760
    %1501 = vmatpush.msra.mxu0 %v1500
    %v1502 = vand.u32 %v135, 4294901760
    %1503 = vmatpush.msra.mxu0 %v1502
    %v1504 = vand.u32 %v134, 4294901760
    %1505 = vmatpush.msra.mxu0 %v1504
    %v1506 = vand.u32 %v133, 4294901760
    %1507 = vmatpush.msra.mxu0 %v1506
    %v1508 = vand.u32 %v84, 4294901760
    %1509 = vmatmul.f32.gmra.mxu0 %v1508
    %v1510 = vpop.f32.mrf.mxu0
    %v1511 = vadd.f32 %v1474, %v1510
    %1512 = vdwg.mxu0
    %1513 = vst [vmem:[#allocation5] sm:$0xff] %v1511
    // Predicated region
    $region14: #{_atom_embed_padded.1} parent=1 // pred_check
      _
    $region15: #{_atom_embed_padded.1} parent=1 // pred_check_branch
      %1515 = sbr.rel (0) target = $region17
    $region16: #{_atom_embed_padded.1} parent=1 // pred_region
      %1517 = vsyncadd [#allocation4], 0
      %s1519 = sshll.u32 [#allocation5], 4
      %s1520 = int_to_ptr.vmem [resolvable:$true] %s1519
      %s1521 = sshll.u32 %s2, 4
      %s1522 = int_to_ptr.hbm [resolvable:$true] %s1521
      %1524 = dma.vmem_to_hbm [thread:$0]  %s1520, 128, %s1522, [#allocation4]
    $region17: #{_atom_embed_padded.1} parent=1 // pred_fallthru
      _
    // Predicated region
    $region18: #{_atom_embed_padded.1} parent=1 // pred_check
      _
    $region19: #{_atom_embed_padded.1} parent=1 // pred_check_branch
      %1526 = sbr.rel (0) target = $region21
    $region20: #{_atom_embed_padded.1} parent=1 // pred_region
      %1528 = dma.done [#allocation4], 128
    $region21: #{_atom_embed_padded.1} parent=1 // pred_fallthru
      _
    %1529 = vsyncpa [#allocation3], 1
    %1530 = vsyncpa [#allocation4], 1

</llo_original>
